<compile_context>
chip_gen: v6e
topology: v6e:2x2x1
jax: 0.10.0
libtpu: 0.0.40
codegen_flags: <defaults>
</compile_context>

<pallas_src>
import functools
import math

import jax
import jax.numpy as jnp
from jax.experimental import pallas as pl
from jax.experimental.pallas import tpu as pltpu

EPS = 1e-5  # torch.nn.LayerNorm default eps


def _layer_norm(x, g, b):
    mu = jnp.mean(x, axis=-1, keepdims=True)
    var = jnp.mean((x - mu) ** 2, axis=-1, keepdims=True)
    return (x - mu) * jax.lax.rsqrt(var + EPS) * g + b


def _encoder_layer_kernel(
    x_ref, bias_ref,
    wq_ref, bq_ref, wk_ref, bk_ref, wv_ref, bv_ref,
    wo_ref, bo_ref,
    ln1_g_ref, ln1_b_ref,
    w1_ref, b1_ref, w2_ref, b2_ref,
    ln2_g_ref, ln2_b_ref,
    out_ref,
    acc_ref, xb_ref,
    *, num_heads, head_dim,
):
    # grid = (batch, head); head is the inner reduction axis.
    h = pl.program_id(1)
    scale = head_dim ** -0.5

    @pl.when(h == 0)
    def _init():
        acc_ref[...] = jnp.zeros_like(acc_ref)
        xb_ref[...] = x_ref[0].astype(jnp.bfloat16)   # bf16 copy for the MXU

    xb = xb_ref[...]                                   # (T, C) bf16

    # per-head projections (bf16 x bf16 -> f32 accumulation on the MXU)
    q = (jnp.dot(xb, wq_ref[h], preferred_element_type=jnp.float32)
         + bq_ref[h]) * scale
    k = jnp.dot(xb, wk_ref[h], preferred_element_type=jnp.float32) + bk_ref[h]
    v = jnp.dot(xb, wv_ref[h], preferred_element_type=jnp.float32) + bv_ref[h]

    # scores: contract the head dim of q and k directly (no explicit k.T)
    s = jax.lax.dot_general(
        q.astype(jnp.bfloat16), k.astype(jnp.bfloat16),
        (((1,), (1,)), ((), ())),
        preferred_element_type=jnp.float32)
    s = s + bias_ref[0, 0].astype(jnp.float32)

    # softmax in f32.  NOTE: a fully-masked (all -inf) row yields NaN, exactly
    # as in the PyTorch module.
    s = s - jnp.max(s, axis=-1, keepdims=True)
    p = jnp.exp(s)
    p = p * pl.reciprocal(jnp.sum(p, axis=-1, keepdims=True), approx=True)

    ctx = jnp.dot(p.astype(jnp.bfloat16), v.astype(jnp.bfloat16),
                  preferred_element_type=jnp.float32)          # (T, d)

    # lane-dense accumulation of the output projection: sum_h ctx_h @ Wo[h]
    acc_ref[...] += jnp.dot(ctx.astype(jnp.bfloat16), wo_ref[h],
                            preferred_element_type=jnp.float32)

    @pl.when(h == num_heads - 1)
    def _finish():
        x0 = x_ref[0]                                          # (T, C) f32
        attn_out = acc_ref[...] + bo_ref[...]
        # residual + post-LN (sandwich_norm=False branch, layer_scale = 1)
        x1 = _layer_norm(x0 + attn_out, ln1_g_ref[...], ln1_b_ref[...])
        # FFN: relu(x1 @ W1 + b1) @ W2 + b2
        h1 = jnp.maximum(
            jnp.dot(x1.astype(jnp.bfloat16), w1_ref[...],
                    preferred_element_type=jnp.float32) + b1_ref[...],
            0.0)
        y = jnp.dot(h1.astype(jnp.bfloat16), w2_ref[...],
                    preferred_element_type=jnp.float32) + b2_ref[...]
        out_ref[0] = _layer_norm(x1 + y, ln2_g_ref[...], ln2_b_ref[...])


def _nbytes(shape, dtype):
    return math.prod(shape) * jnp.dtype(dtype).itemsize


def graphormer_encoder_layer(x_tbc, params, *, num_heads,
                             self_attn_bias=None,
                             self_attn_padding_mask=None,
                             need_weights=False):
    """x_tbc: (T, B, C) as in fairseq. Returns (x_out (T,B,C), attn=None)."""
    T, B, C = x_tbc.shape
    H = num_heads
    d = C // H
    F = params["w1"].shape[1]

    x_btc = jnp.transpose(x_tbc, (1, 0, 2)).astype(jnp.float32)   # (B, T, C)

    if self_attn_bias is None:
        bias = jnp.zeros((B, H, T, T), jnp.float32)
    else:
        bias = self_attn_bias.astype(jnp.float32)
    if self_attn_padding_mask is not None:
        # masked_fill(-inf) on key positions, broadcast over heads & queries
        pad = self_attn_padding_mask.astype(bool)                 # (B, T)
        bias = jnp.where(pad[:, None, None, :], -jnp.inf, bias)
    bias = bias.astype(jnp.bfloat16)   # halves the dominant HBM stream
    # TODO(synk): self_attn_mask (additive attn_mask) would fold into `bias`
    # the same way; not exercised here.

    bf = lambda w: w.astype(jnp.bfloat16)
    # head-major weight layouts so the kernel indexes the leading (head) axis
    wq = bf(params["wq"].reshape(C, H, d).transpose(1, 0, 2))     # (H, C, d)
    wk = bf(params["wk"].reshape(C, H, d).transpose(1, 0, 2))
    wv = bf(params["wv"].reshape(C, H, d).transpose(1, 0, 2))
    wo = bf(params["wo"].reshape(H, d, C))                        # (H, d, C)
    bq = params["bq"].reshape(H, 1, d).astype(jnp.float32)
    bk = params["bk"].reshape(H, 1, d).astype(jnp.float32)
    bv = params["bv"].reshape(H, 1, d).astype(jnp.float32)
    w1 = bf(params["w1"])
    w2 = bf(params["w2"])

    row = lambda v: v.reshape(1, -1).astype(jnp.float32)

    kernel = functools.partial(_encoder_layer_kernel,
                               num_heads=H, head_dim=d)

    full = lambda shape: pl.BlockSpec(shape, lambda b, h: (0,) * len(shape))

    # Explicit VMEM budget from the actual block sizes (conservatively assume
    # everything is double-buffered), instead of relying on the scoped default.
    est = 2 * (2 * _nbytes((1, T, C), jnp.float32)            # x + out blocks
               + _nbytes((1, 1, T, T), jnp.bfloat16)          # bias block
               + 3 * _nbytes((H, C, d), jnp.bfloat16)         # Wq/Wk/Wv
               + _nbytes((H, d, C), jnp.bfloat16)             # Wo
               + _nbytes((C, F), jnp.bfloat16)                # W1
               + _nbytes((F, C), jnp.bfloat16)                # W2
               + 10 * _nbytes((1, max(C, F)), jnp.float32))   # small vectors
    est += _nbytes((T, C), jnp.float32) + _nbytes((T, C), jnp.bfloat16)
    vmem_limit = int(min(64 * 1024 * 1024, max(4 * 1024 * 1024, 2 * est)))

    out = pl.pallas_call(
        kernel,
        out_shape=jax.ShapeDtypeStruct((B, T, C), jnp.float32),
        grid_spec=pltpu.PrefetchScalarGridSpec(
            num_scalar_prefetch=0,
            grid=(B, H),
            in_specs=[
                pl.BlockSpec((1, T, C), lambda b, h: (b, 0, 0)),        # x
                pl.BlockSpec((1, 1, T, T), lambda b, h: (b, h, 0, 0)),  # bias
                full((H, C, d)), full((H, 1, d)),                       # Wq, bq
                full((H, C, d)), full((H, 1, d)),                       # Wk, bk
                full((H, C, d)), full((H, 1, d)),                       # Wv, bv
                full((H, d, C)), full((1, C)),                          # Wo, bo
                full((1, C)), full((1, C)),                             # ln1 g,b
                full((C, F)), full((1, F)),                             # W1, b1
                full((F, C)), full((1, C)),                             # W2, b2
                full((1, C)), full((1, C)),                             # ln2 g,b
            ],
            out_specs=pl.BlockSpec((1, T, C), lambda b, h: (b, 0, 0)),
            scratch_shapes=[pltpu.VMEM((T, C), jnp.float32),    # attn_out acc
                            pltpu.VMEM((T, C), jnp.bfloat16)],  # bf16 copy of x
        ),
        compiler_params=pltpu.CompilerParams(
            dimension_semantics=("parallel", "arbitrary"),
            vmem_limit_bytes=vmem_limit),
    )(
        x_btc, bias,
        wq, bq, wk, bk, wv, bv,
        wo, row(params["bo"]),
        row(params["ln1_g"]), row(params["ln1_b"]),
        w1, row(params["b1"]),
        w2, row(params["b2"]),
        row(params["ln2_g"]), row(params["ln2_b"]),
    )

    x_out = jnp.transpose(out, (1, 0, 2))            # back to (T, B, C)
    attn = None  # need_weights=False path of the PyTorch module
    return x_out, attn


def _reference(x_tbc, params, num_heads, bias):
    """Pure-JAX f32 reference of the same forward pass (correctness check)."""
    T, B, C = x_tbc.shape
    H = num_heads
    d = C // H
    x = jnp.transpose(x_tbc, (1, 0, 2))              # (B, T, C)

    def ln(v, g, b):
        mu = v.mean(-1, keepdims=True)
        var = ((v - mu) ** 2).mean(-1, keepdims=True)
        return (v - mu) / jnp.sqrt(var + EPS) * g + b

    q = (x @ params["wq"] + params["bq"]) * (d ** -0.5)
    k = x @ params["wk"] + params["bk"]
    v = x @ params["wv"] + params["bv"]
    q = q.reshape(B, T, H, d).transpose(0, 2, 1, 3)
    k = k.reshape(B, T, H, d).transpose(0, 2, 1, 3)
    v = v.reshape(B, T, H, d).transpose(0, 2, 1, 3)
    s = jnp.einsum("bhqd,bhkd->bhqk", q, k) + bias
    p = jax.nn.softmax(s, axis=-1)
    ctx = jnp.einsum("bhqk,bhkd->bhqd", p, v)
    ctx = ctx.transpose(0, 2, 1, 3).reshape(B, T, C)
    attn_out = ctx @ params["wo"] + params["bo"]
    x1 = ln(x + attn_out, params["ln1_g"], params["ln1_b"])
    h1 = jnp.maximum(x1 @ params["w1"] + params["b1"], 0.0)
    y = h1 @ params["w2"] + params["b2"]
    out = ln(x1 + y, params["ln2_g"], params["ln2_b"])
    return jnp.transpose(out, (1, 0, 2))


def _init_params(key, C, F):
    keys = jax.random.split(key, 12)
    n = lambda k, s: (0.02 * jax.random.normal(k, s)).astype(jnp.float32)
    return {
        "wq": n(keys[0], (C, C)), "bq": n(keys[1], (C,)),
        "wk": n(keys[2], (C, C)), "bk": n(keys[3], (C,)),
        "wv": n(keys[4], (C, C)), "bv": n(keys[5], (C,)),
        "wo": n(keys[6], (C, C)), "bo": n(keys[7], (C,)),
        "ln1_g": jnp.ones((C,), jnp.float32), "ln1_b": jnp.zeros((C,), jnp.float32),
        "w1": n(keys[8], (C, F)), "b1": n(keys[9], (F,)),
        "w2": n(keys[10], (F, C)), "b2": n(keys[11], (C,)),
        "ln2_g": jnp.ones((C,), jnp.float32), "ln2_b": jnp.zeros((C,), jnp.float32),
    }


if __name__ == "__main__":
    # tile-friendly small shapes: T=32 tokens, B=2 graphs, C=128 embed
    # (lane-dense), H=4 heads (head_dim=32), F=256 ffn
    T, B, C, H, F = 32, 2, 128, 4, 256
    key = jax.random.PRNGKey(0)
    k_x, k_bias, k_p = jax.random.split(key, 3)

    params = _init_params(k_p, C, F)
    x_tbc = jax.random.normal(k_x, (T, B, C), jnp.float32)
    attn_bias = 0.1 * jax.random.normal(k_bias, (B, H, T, T), jnp.float32)

    # pad the last 4 key positions of the second graph (no fully-padded rows)
    pad_mask = jnp.zeros((B, T), jnp.bool_).at[1, T - 4:].set(True)

    out, attn = graphormer_encoder_layer(
        x_tbc, params, num_heads=H,
        self_attn_bias=attn_bias,
        self_attn_padding_mask=pad_mask,
        need_weights=False)
    out = jax.block_until_ready(out)

    # f32 reference with the padding mask folded into the bias the same way
    bias_ref = jnp.where(pad_mask[:, None, None, :].astype(bool),
                         -jnp.inf, attn_bias)
    ref = _reference(x_tbc, params, H, bias_ref)

    assert out.shape == (T, B, C) and attn is None
    max_err = float(jnp.max(jnp.abs(out - ref)))
    # bf16 MXU matmuls + approx reciprocal vs f32 reference
    assert jnp.allclose(out, ref, atol=2e-2, rtol=2e-2), \
        f"mismatch vs reference (max abs err {max_err})"

    print("KERNEL_OK")
</pallas_src>

<mosaic_0001>
module attributes {stable_mosaic.version = 11 : i64} {
  func.func @_encoder_layer_kernel(%arg0: i32, %arg1: i32, %arg2: memref<1x32x128xf32, #tpu.memory_space<vmem>>, %arg3: memref<1x1x32x32xbf16, #tpu.memory_space<vmem>>, %arg4: memref<4x128x32xbf16, #tpu.memory_space<vmem>>, %arg5: memref<4x1x32xf32, #tpu.memory_space<vmem>>, %arg6: memref<4x128x32xbf16, #tpu.memory_space<vmem>>, %arg7: memref<4x1x32xf32, #tpu.memory_space<vmem>>, %arg8: memref<4x128x32xbf16, #tpu.memory_space<vmem>>, %arg9: memref<4x1x32xf32, #tpu.memory_space<vmem>>, %arg10: memref<4x32x128xbf16, #tpu.memory_space<vmem>>, %arg11: memref<1x128xf32, #tpu.memory_space<vmem>>, %arg12: memref<1x128xf32, #tpu.memory_space<vmem>>, %arg13: memref<1x128xf32, #tpu.memory_space<vmem>>, %arg14: memref<128x256xbf16, #tpu.memory_space<vmem>>, %arg15: memref<1x256xf32, #tpu.memory_space<vmem>>, %arg16: memref<256x128xbf16, #tpu.memory_space<vmem>>, %arg17: memref<1x128xf32, #tpu.memory_space<vmem>>, %arg18: memref<1x128xf32, #tpu.memory_space<vmem>>, %arg19: memref<1x128xf32, #tpu.memory_space<vmem>>, %arg20: memref<1x32x128xf32, #tpu.memory_space<vmem>>, %arg21: memref<32x128xf32, #tpu.memory_space<vmem>>, %arg22: memref<32x128xbf16, #tpu.memory_space<vmem>>) attributes {dimension_semantics = [#tpu.dimension_semantics<parallel>, #tpu.dimension_semantics<arbitrary>], iteration_bounds = array<i64: 2, 4>, scalar_prefetch = 0 : i64, scratch_operands = 2 : i64, tpu.core_type = #tpu.core_type<tc>, window_params = [{transform_indices = @transform_0, window_bounds = array<i64: 1, 32, 128>}, {transform_indices = @transform_1, window_bounds = array<i64: 1, 1, 32, 32>}, {pipeline_mode = #tpu.pipeline_mode<synchronous>, transform_indices = @transform_2, window_bounds = array<i64: 4, 128, 32>}, {pipeline_mode = #tpu.pipeline_mode<synchronous>, transform_indices = @transform_3, window_bounds = array<i64: 4, 1, 32>}, {pipeline_mode = #tpu.pipeline_mode<synchronous>, transform_indices = @transform_4, window_bounds = array<i64: 4, 128, 32>}, {pipeline_mode = #tpu.pipeline_mode<synchronous>, transform_indices = @transform_5, window_bounds = array<i64: 4, 1, 32>}, {pipeline_mode = #tpu.pipeline_mode<synchronous>, transform_indices = @transform_6, window_bounds = array<i64: 4, 128, 32>}, {pipeline_mode = #tpu.pipeline_mode<synchronous>, transform_indices = @transform_7, window_bounds = array<i64: 4, 1, 32>}, {pipeline_mode = #tpu.pipeline_mode<synchronous>, transform_indices = @transform_8, window_bounds = array<i64: 4, 32, 128>}, {pipeline_mode = #tpu.pipeline_mode<synchronous>, transform_indices = @transform_9, window_bounds = array<i64: 1, 128>}, {pipeline_mode = #tpu.pipeline_mode<synchronous>, transform_indices = @transform_10, window_bounds = array<i64: 1, 128>}, {pipeline_mode = #tpu.pipeline_mode<synchronous>, transform_indices = @transform_11, window_bounds = array<i64: 1, 128>}, {pipeline_mode = #tpu.pipeline_mode<synchronous>, transform_indices = @transform_12, window_bounds = array<i64: 128, 256>}, {pipeline_mode = #tpu.pipeline_mode<synchronous>, transform_indices = @transform_13, window_bounds = array<i64: 1, 256>}, {pipeline_mode = #tpu.pipeline_mode<synchronous>, transform_indices = @transform_14, window_bounds = array<i64: 256, 128>}, {pipeline_mode = #tpu.pipeline_mode<synchronous>, transform_indices = @transform_15, window_bounds = array<i64: 1, 128>}, {pipeline_mode = #tpu.pipeline_mode<synchronous>, transform_indices = @transform_16, window_bounds = array<i64: 1, 128>}, {pipeline_mode = #tpu.pipeline_mode<synchronous>, transform_indices = @transform_17, window_bounds = array<i64: 1, 128>}, {transform_indices = @transform_18, window_bounds = array<i64: 1, 32, 128>}]} {
    %c0_i32 = arith.constant 0 : i32
    %0 = arith.cmpi eq, %arg1, %c0_i32 : i32
    %1 = arith.extui %0 : i1 to i32
    %c0_i32_0 = arith.constant 0 : i32
    %2 = arith.cmpi ne, %1, %c0_i32_0 : i32
    scf.if %2 {
      %cst_33 = arith.constant 0.000000e+00 : f32
      %64 = vector.broadcast %cst_33 : f32 to vector<32x128xf32>
      %c0_34 = arith.constant 0 : index
      %c0_35 = arith.constant 0 : index
      %65 = vector.load %arg21[%c0_34, %c0_35] : memref<32x128xf32, #tpu.memory_space<vmem>>, vector<32x128xf32>
      tpu.vector_store %arg21[%c0_34, %c0_35], %64 {strides = array<i32>} : memref<32x128xf32, #tpu.memory_space<vmem>>, vector<32x128xf32>,
      %c0_36 = arith.constant 0 : index
      %c0_37 = arith.constant 0 : index
      %c0_38 = arith.constant 0 : index
      %66 = vector.load %arg2[%c0_36, %c0_37, %c0_38] : memref<1x32x128xf32, #tpu.memory_space<vmem>>, vector<1x32x128xf32>
      %67 = vector.shape_cast %66 : vector<1x32x128xf32> to vector<32x128xf32>
      %68 = arith.truncf %67 : vector<32x128xf32> to vector<32x128xbf16>
      %c0_39 = arith.constant 0 : index
      %c0_40 = arith.constant 0 : index
      %69 = vector.load %arg22[%c0_39, %c0_40] : memref<32x128xbf16, #tpu.memory_space<vmem>>, vector<32x128xbf16>
      tpu.vector_store %arg22[%c0_39, %c0_40], %68 {strides = array<i32>} : memref<32x128xbf16, #tpu.memory_space<vmem>>, vector<32x128xbf16>,
    } else {
    }
    %c0 = arith.constant 0 : index
    %c0_1 = arith.constant 0 : index
    %3 = vector.load %arg22[%c0, %c0_1] : memref<32x128xbf16, #tpu.memory_space<vmem>>, vector<32x128xbf16>
    %4 = arith.index_cast %arg1 : i32 to index
    %c0_2 = arith.constant 0 : index
    %c0_3 = arith.constant 0 : index
    %5 = vector.load %arg4[%4, %c0_2, %c0_3] : memref<4x128x32xbf16, #tpu.memory_space<vmem>>, vector<1x128x32xbf16>
    %6 = vector.shape_cast %5 : vector<1x128x32xbf16> to vector<128x32xbf16>
    %cst = arith.constant dense<0.000000e+00> : vector<32x32xf32>
    %7 = tpu.matmul %3, %6, %cst {dimension_numbers = #tpu.dot_dimension_numbers<[1], [0], [0], [1], [0, 0, 1, 1], [], []>} : vector<32x128xbf16>, vector<128x32xbf16>, vector<32x32xf32> -> vector<32x32xf32>
    %8 = arith.index_cast %arg1 : i32 to index
    %c0_4 = arith.constant 0 : index
    %c0_5 = arith.constant 0 : index
    %9 = vector.load %arg5[%8, %c0_4, %c0_5] : memref<4x1x32xf32, #tpu.memory_space<vmem>>, vector<1x1x32xf32>
    %10 = vector.shape_cast %9 : vector<1x1x32xf32> to vector<1x32xf32>
    %11 = vector.broadcast %10 : vector<1x32xf32> to vector<32x32xf32>
    %12 = arith.addf %7, %11 : vector<32x32xf32>
    %cst_6 = arith.constant 0.176776692 : f32
    %13 = vector.broadcast %cst_6 : f32 to vector<32x32xf32>
    %14 = arith.mulf %12, %13 : vector<32x32xf32>
    %15 = arith.index_cast %arg1 : i32 to index
    %c0_7 = arith.constant 0 : index
    %c0_8 = arith.constant 0 : index
    %16 = vector.load %arg6[%15, %c0_7, %c0_8] : memref<4x128x32xbf16, #tpu.memory_space<vmem>>, vector<1x128x32xbf16>
    %17 = vector.shape_cast %16 : vector<1x128x32xbf16> to vector<128x32xbf16>
    %cst_9 = arith.constant dense<0.000000e+00> : vector<32x32xf32>
    %18 = tpu.matmul %3, %17, %cst_9 {dimension_numbers = #tpu.dot_dimension_numbers<[1], [0], [0], [1], [0, 0, 1, 1], [], []>} : vector<32x128xbf16>, vector<128x32xbf16>, vector<32x32xf32> -> vector<32x32xf32>
    %19 = arith.index_cast %arg1 : i32 to index
    %c0_10 = arith.constant 0 : index
    %c0_11 = arith.constant 0 : index
    %20 = vector.load %arg7[%19, %c0_10, %c0_11] : memref<4x1x32xf32, #tpu.memory_space<vmem>>, vector<1x1x32xf32>
    %21 = vector.shape_cast %20 : vector<1x1x32xf32> to vector<1x32xf32>
    %22 = vector.broadcast %21 : vector<1x32xf32> to vector<32x32xf32>
    %23 = arith.addf %18, %22 : vector<32x32xf32>
    %24 = arith.index_cast %arg1 : i32 to index
    %c0_12 = arith.constant 0 : index
    %c0_13 = arith.constant 0 : index
    %25 = vector.load %arg8[%24, %c0_12, %c0_13] : memref<4x128x32xbf16, #tpu.memory_space<vmem>>, vector<1x128x32xbf16>
    %26 = vector.shape_cast %25 : vector<1x128x32xbf16> to vector<128x32xbf16>
    %cst_14 = arith.constant dense<0.000000e+00> : vector<32x32xf32>
    %27 = tpu.matmul %3, %26, %cst_14 {dimension_numbers = #tpu.dot_dimension_numbers<[1], [0], [0], [1], [0, 0, 1, 1], [], []>} : vector<32x128xbf16>, vector<128x32xbf16>, vector<32x32xf32> -> vector<32x32xf32>
    %28 = arith.index_cast %arg1 : i32 to index
    %c0_15 = arith.constant 0 : index
    %c0_16 = arith.constant 0 : index
    %29 = vector.load %arg9[%28, %c0_15, %c0_16] : memref<4x1x32xf32, #tpu.memory_space<vmem>>, vector<1x1x32xf32>
    %30 = vector.shape_cast %29 : vector<1x1x32xf32> to vector<1x32xf32>
    %31 = vector.broadcast %30 : vector<1x32xf32> to vector<32x32xf32>
    %32 = arith.addf %27, %31 : vector<32x32xf32>
    %33 = arith.truncf %14 : vector<32x32xf32> to vector<32x32xbf16>
    %34 = arith.truncf %23 : vector<32x32xf32> to vector<32x32xbf16>
    %cst_17 = arith.constant dense<0.000000e+00> : vector<32x32xf32>
    %35 = tpu.matmul %33, %34, %cst_17 {dimension_numbers = #tpu.dot_dimension_numbers<[1], [1], [0], [0], [0, 0, 1, 0], [], []>} : vector<32x32xbf16>, vector<32x32xbf16>, vector<32x32xf32> -> vector<32x32xf32>
    %c0_18 = arith.constant 0 : index
    %c0_19 = arith.constant 0 : index
    %c0_20 = arith.constant 0 : index
    %c0_21 = arith.constant 0 : index
    %36 = vector.load %arg3[%c0_18, %c0_19, %c0_20, %c0_21] : memref<1x1x32x32xbf16, #tpu.memory_space<vmem>>, vector<1x1x32x32xbf16>
    %37 = vector.shape_cast %36 : vector<1x1x32x32xbf16> to vector<32x32xbf16>
    %38 = arith.extf %37 : vector<32x32xbf16> to vector<32x32xf32>
    %39 = arith.addf %35, %38 : vector<32x32xf32>
    %cst_22 = arith.constant dense<0xFF800000> : vector<32xf32>
    %40 = vector.multi_reduction <maximumf>, %39, %cst_22 [1] : vector<32x32xf32> to vector<32xf32>
    %41 = vector.shape_cast %40 : vector<32xf32> to vector<32x1xf32>
    %42 = vector.broadcast %41 : vector<32x1xf32> to vector<32x32xf32>
    %43 = arith.subf %39, %42 : vector<32x32xf32>
    %44 = math.exp %43 : vector<32x32xf32>
    %cst_23 = arith.constant dense<0.000000e+00> : vector<32xf32>
    %45 = vector.multi_reduction <add>, %44, %cst_23 [1] : vector<32x32xf32> to vector<32xf32>
    %46 = vector.shape_cast %45 : vector<32xf32> to vector<32x1xf32>
    %47 = tpu.reciprocal %46 {approx = true} : vector<32x1xf32> -> vector<32x1xf32>
    %48 = vector.broadcast %47 : vector<32x1xf32> to vector<32x32xf32>
    %49 = arith.mulf %44, %48 : vector<32x32xf32>
    %50 = arith.truncf %49 : vector<32x32xf32> to vector<32x32xbf16>
    %51 = arith.truncf %32 : vector<32x32xf32> to vector<32x32xbf16>
    %cst_24 = arith.constant dense<0.000000e+00> : vector<32x32xf32>
    %52 = tpu.matmul %50, %51, %cst_24 {dimension_numbers = #tpu.dot_dimension_numbers<[1], [0], [0], [1], [0, 0, 1, 1], [], []>} : vector<32x32xbf16>, vector<32x32xbf16>, vector<32x32xf32> -> vector<32x32xf32>
    %c0_25 = arith.constant 0 : index
    %c0_26 = arith.constant 0 : index
    %53 = vector.load %arg21[%c0_25, %c0_26] : memref<32x128xf32, #tpu.memory_space<vmem>>, vector<32x128xf32>
    %54 = arith.truncf %52 : vector<32x32xf32> to vector<32x32xbf16>
    %55 = arith.index_cast %arg1 : i32 to index
    %c0_27 = arith.constant 0 : index
    %c0_28 = arith.constant 0 : index
    %56 = vector.load %arg10[%55, %c0_27, %c0_28] : memref<4x32x128xbf16, #tpu.memory_space<vmem>>, vector<1x32x128xbf16>
    %57 = vector.shape_cast %56 : vector<1x32x128xbf16> to vector<32x128xbf16>
    %cst_29 = arith.constant dense<0.000000e+00> : vector<32x128xf32>
    %58 = tpu.matmul %54, %57, %cst_29 {dimension_numbers = #tpu.dot_dimension_numbers<[1], [0], [0], [1], [0, 0, 1, 1], [], []>} : vector<32x32xbf16>, vector<32x128xbf16>, vector<32x128xf32> -> vector<32x128xf32>
    %59 = arith.addf %53, %58 : vector<32x128xf32>
    %c0_30 = arith.constant 0 : index
    %c0_31 = arith.constant 0 : index
    %60 = vector.load %arg21[%c0_30, %c0_31] : memref<32x128xf32, #tpu.memory_space<vmem>>, vector<32x128xf32>
    tpu.vector_store %arg21[%c0_30, %c0_31], %59 {strides = array<i32>} : memref<32x128xf32, #tpu.memory_space<vmem>>, vector<32x128xf32>,
    %c3_i32 = arith.constant 3 : i32
    %61 = arith.cmpi eq, %arg1, %c3_i32 : i32
    %62 = arith.extui %61 : i1 to i32
    %c0_i32_32 = arith.constant 0 : i32
    %63 = arith.cmpi ne, %62, %c0_i32_32 : i32
    scf.if %63 {
      %c0_33 = arith.constant 0 : index
      %c0_34 = arith.constant 0 : index
      %c0_35 = arith.constant 0 : index
      %64 = vector.load %arg2[%c0_33, %c0_34, %c0_35] : memref<1x32x128xf32, #tpu.memory_space<vmem>>, vector<1x32x128xf32>
      %65 = vector.shape_cast %64 : vector<1x32x128xf32> to vector<32x128xf32>
      %c0_36 = arith.constant 0 : index
      %c0_37 = arith.constant 0 : index
      %66 = vector.load %arg21[%c0_36, %c0_37] : memref<32x128xf32, #tpu.memory_space<vmem>>, vector<32x128xf32>
      %c0_38 = arith.constant 0 : index
      %c0_39 = arith.constant 0 : index
      %67 = vector.load %arg11[%c0_38, %c0_39] : memref<1x128xf32, #tpu.memory_space<vmem>>, vector<1x128xf32>
      %68 = vector.broadcast %67 : vector<1x128xf32> to vector<32x128xf32>
      %69 = arith.addf %66, %68 : vector<32x128xf32>
      %70 = arith.addf %65, %69 : vector<32x128xf32>
      %c0_40 = arith.constant 0 : index
      %c0_41 = arith.constant 0 : index
      %71 = vector.load %arg12[%c0_40, %c0_41] : memref<1x128xf32, #tpu.memory_space<vmem>>, vector<1x128xf32>
      %c0_42 = arith.constant 0 : index
      %c0_43 = arith.constant 0 : index
      %72 = vector.load %arg13[%c0_42, %c0_43] : memref<1x128xf32, #tpu.memory_space<vmem>>, vector<1x128xf32>
      %cst_44 = arith.constant dense<0.000000e+00> : vector<32xf32>
      %73 = vector.multi_reduction <add>, %70, %cst_44 [1] : vector<32x128xf32> to vector<32xf32>
      %74 = vector.shape_cast %73 : vector<32xf32> to vector<32x1xf32>
      %cst_45 = arith.constant 1.280000e+02 : f32
      %75 = vector.broadcast %cst_45 : f32 to vector<32x1xf32>
      %76 = arith.divf %74, %75 : vector<32x1xf32>
      %77 = vector.broadcast %76 : vector<32x1xf32> to vector<32x128xf32>
      %78 = arith.subf %70, %77 : vector<32x128xf32>
      %79 = arith.mulf %78, %78 : vector<32x128xf32>
      %cst_46 = arith.constant dense<0.000000e+00> : vector<32xf32>
      %80 = vector.multi_reduction <add>, %79, %cst_46 [1] : vector<32x128xf32> to vector<32xf32>
      %81 = vector.shape_cast %80 : vector<32xf32> to vector<32x1xf32>
      %cst_47 = arith.constant 1.280000e+02 : f32
      %82 = vector.broadcast %cst_47 : f32 to vector<32x1xf32>
      %83 = arith.divf %81, %82 : vector<32x1xf32>
      %84 = vector.broadcast %76 : vector<32x1xf32> to vector<32x128xf32>
      %85 = arith.subf %70, %84 : vector<32x128xf32>
      %cst_48 = arith.constant 9.99999974E-6 : f32
      %86 = vector.broadcast %cst_48 : f32 to vector<32x1xf32>
      %87 = arith.addf %83, %86 : vector<32x1xf32>
      %88 = math.rsqrt %87 : vector<32x1xf32>
      %89 = vector.broadcast %88 : vector<32x1xf32> to vector<32x128xf32>
      %90 = arith.mulf %85, %89 : vector<32x128xf32>
      %91 = vector.broadcast %71 : vector<1x128xf32> to vector<32x128xf32>
      %92 = arith.mulf %90, %91 : vector<32x128xf32>
      %93 = vector.broadcast %72 : vector<1x128xf32> to vector<32x128xf32>
      %94 = arith.addf %92, %93 : vector<32x128xf32>
      %95 = arith.truncf %94 : vector<32x128xf32> to vector<32x128xbf16>
      %c0_49 = arith.constant 0 : index
      %c0_50 = arith.constant 0 : index
      %96 = vector.load %arg14[%c0_49, %c0_50] : memref<128x256xbf16, #tpu.memory_space<vmem>>, vector<128x256xbf16>
      %cst_51 = arith.constant dense<0.000000e+00> : vector<32x256xf32>
      %97 = tpu.matmul %95, %96, %cst_51 {dimension_numbers = #tpu.dot_dimension_numbers<[1], [0], [0], [1], [0, 0, 1, 1], [], []>} : vector<32x128xbf16>, vector<128x256xbf16>, vector<32x256xf32> -> vector<32x256xf32>
      %c0_52 = arith.constant 0 : index
      %c0_53 = arith.constant 0 : index
      %98 = vector.load %arg15[%c0_52, %c0_53] : memref<1x256xf32, #tpu.memory_space<vmem>>, vector<1x256xf32>
      %99 = vector.broadcast %98 : vector<1x256xf32> to vector<32x256xf32>
      %100 = arith.addf %97, %99 : vector<32x256xf32>
      %cst_54 = arith.constant 0.000000e+00 : f32
      %101 = vector.broadcast %cst_54 : f32 to vector<32x256xf32>
      %102 = arith.maximumf %100, %101 : vector<32x256xf32>
      %103 = arith.truncf %102 : vector<32x256xf32> to vector<32x256xbf16>
      %c0_55 = arith.constant 0 : index
      %c0_56 = arith.constant 0 : index
      %104 = vector.load %arg16[%c0_55, %c0_56] : memref<256x128xbf16, #tpu.memory_space<vmem>>, vector<256x128xbf16>
      %cst_57 = arith.constant dense<0.000000e+00> : vector<32x128xf32>
      %105 = tpu.matmul %103, %104, %cst_57 {dimension_numbers = #tpu.dot_dimension_numbers<[1], [0], [0], [1], [0, 0, 1, 1], [], []>} : vector<32x256xbf16>, vector<256x128xbf16>, vector<32x128xf32> -> vector<32x128xf32>
      %c0_58 = arith.constant 0 : index
      %c0_59 = arith.constant 0 : index
      %106 = vector.load %arg17[%c0_58, %c0_59] : memref<1x128xf32, #tpu.memory_space<vmem>>, vector<1x128xf32>
      %107 = vector.broadcast %106 : vector<1x128xf32> to vector<32x128xf32>
      %108 = arith.addf %105, %107 : vector<32x128xf32>
      %109 = arith.addf %94, %108 : vector<32x128xf32>
      %c0_60 = arith.constant 0 : index
      %c0_61 = arith.constant 0 : index
      %110 = vector.load %arg18[%c0_60, %c0_61] : memref<1x128xf32, #tpu.memory_space<vmem>>, vector<1x128xf32>
      %c0_62 = arith.constant 0 : index
      %c0_63 = arith.constant 0 : index
      %111 = vector.load %arg19[%c0_62, %c0_63] : memref<1x128xf32, #tpu.memory_space<vmem>>, vector<1x128xf32>
      %cst_64 = arith.constant dense<0.000000e+00> : vector<32xf32>
      %112 = vector.multi_reduction <add>, %109, %cst_64 [1] : vector<32x128xf32> to vector<32xf32>
      %113 = vector.shape_cast %112 : vector<32xf32> to vector<32x1xf32>
      %cst_65 = arith.constant 1.280000e+02 : f32
      %114 = vector.broadcast %cst_65 : f32 to vector<32x1xf32>
      %115 = arith.divf %113, %114 : vector<32x1xf32>
      %116 = vector.broadcast %115 : vector<32x1xf32> to vector<32x128xf32>
      %117 = arith.subf %109, %116 : vector<32x128xf32>
      %118 = arith.mulf %117, %117 : vector<32x128xf32>
      %cst_66 = arith.constant dense<0.000000e+00> : vector<32xf32>
      %119 = vector.multi_reduction <add>, %118, %cst_66 [1] : vector<32x128xf32> to vector<32xf32>
      %120 = vector.shape_cast %119 : vector<32xf32> to vector<32x1xf32>
      %cst_67 = arith.constant 1.280000e+02 : f32
      %121 = vector.broadcast %cst_67 : f32 to vector<32x1xf32>
      %122 = arith.divf %120, %121 : vector<32x1xf32>
      %123 = vector.broadcast %115 : vector<32x1xf32> to vector<32x128xf32>
      %124 = arith.subf %109, %123 : vector<32x128xf32>
      %cst_68 = arith.constant 9.99999974E-6 : f32
      %125 = vector.broadcast %cst_68 : f32 to vector<32x1xf32>
      %126 = arith.addf %122, %125 : vector<32x1xf32>
      %127 = math.rsqrt %126 : vector<32x1xf32>
      %128 = vector.broadcast %127 : vector<32x1xf32> to vector<32x128xf32>
      %129 = arith.mulf %124, %128 : vector<32x128xf32>
      %130 = vector.broadcast %110 : vector<1x128xf32> to vector<32x128xf32>
      %131 = arith.mulf %129, %130 : vector<32x128xf32>
      %132 = vector.broadcast %111 : vector<1x128xf32> to vector<32x128xf32>
      %133 = arith.addf %131, %132 : vector<32x128xf32>
      %c0_69 = arith.constant 0 : index
      %c0_70 = arith.constant 0 : index
      %c0_71 = arith.constant 0 : index
      %134 = vector.load %arg20[%c0_69, %c0_70, %c0_71] : memref<1x32x128xf32, #tpu.memory_space<vmem>>, vector<1x32x128xf32>
      %135 = vector.shape_cast %134 : vector<1x32x128xf32> to vector<32x128xf32>
      %136 = vector.shape_cast %133 : vector<32x128xf32> to vector<1x32x128xf32>
      tpu.vector_store %arg20[%c0_69, %c0_70, %c0_71], %136 {strides = array<i32>} : memref<1x32x128xf32, #tpu.memory_space<vmem>>, vector<1x32x128xf32>,
    } else {
    }
    return
  }
  func.func @transform_0(%arg0: i32, %arg1: i32) -> (i32, i32, i32) {
    %c0_i32 = arith.constant 0 : i32
    %c0_i32_0 = arith.constant 0 : i32
    %c0_i32_1 = arith.constant 0 : i32
    return %arg0, %c0_i32, %c0_i32_0 : i32, i32, i32
  }
  func.func @transform_1(%arg0: i32, %arg1: i32) -> (i32, i32, i32, i32) {
    %c0_i32 = arith.constant 0 : i32
    %c0_i32_0 = arith.constant 0 : i32
    %c0_i32_1 = arith.constant 0 : i32
    return %arg0, %arg1, %c0_i32, %c0_i32_0 : i32, i32, i32, i32
  }
  func.func @transform_2(%arg0: i32, %arg1: i32) -> (i32, i32, i32) {
    %c0_i32 = arith.constant 0 : i32
    %c0_i32_0 = arith.constant 0 : i32
    %c0_i32_1 = arith.constant 0 : i32
    %c0_i32_2 = arith.constant 0 : i32
    return %c0_i32, %c0_i32_0, %c0_i32_1 : i32, i32, i32
  }
  func.func @transform_3(%arg0: i32, %arg1: i32) -> (i32, i32, i32) {
    %c0_i32 = arith.constant 0 : i32
    %c0_i32_0 = arith.constant 0 : i32
    %c0_i32_1 = arith.constant 0 : i32
    %c0_i32_2 = arith.constant 0 : i32
    return %c0_i32, %c0_i32_0, %c0_i32_1 : i32, i32, i32
  }
  func.func @transform_4(%arg0: i32, %arg1: i32) -> (i32, i32, i32) {
    %c0_i32 = arith.constant 0 : i32
    %c0_i32_0 = arith.constant 0 : i32
    %c0_i32_1 = arith.constant 0 : i32
    %c0_i32_2 = arith.constant 0 : i32
    return %c0_i32, %c0_i32_0, %c0_i32_1 : i32, i32, i32
  }
  func.func @transform_5(%arg0: i32, %arg1: i32) -> (i32, i32, i32) {
    %c0_i32 = arith.constant 0 : i32
    %c0_i32_0 = arith.constant 0 : i32
    %c0_i32_1 = arith.constant 0 : i32
    %c0_i32_2 = arith.constant 0 : i32
    return %c0_i32, %c0_i32_0, %c0_i32_1 : i32, i32, i32
  }
  func.func @transform_6(%arg0: i32, %arg1: i32) -> (i32, i32, i32) {
    %c0_i32 = arith.constant 0 : i32
    %c0_i32_0 = arith.constant 0 : i32
    %c0_i32_1 = arith.constant 0 : i32
    %c0_i32_2 = arith.constant 0 : i32
    return %c0_i32, %c0_i32_0, %c0_i32_1 : i32, i32, i32
  }
  func.func @transform_7(%arg0: i32, %arg1: i32) -> (i32, i32, i32) {
    %c0_i32 = arith.constant 0 : i32
    %c0_i32_0 = arith.constant 0 : i32
    %c0_i32_1 = arith.constant 0 : i32
    %c0_i32_2 = arith.constant 0 : i32
    return %c0_i32, %c0_i32_0, %c0_i32_1 : i32, i32, i32
  }
  func.func @transform_8(%arg0: i32, %arg1: i32) -> (i32, i32, i32) {
    %c0_i32 = arith.constant 0 : i32
    %c0_i32_0 = arith.constant 0 : i32
    %c0_i32_1 = arith.constant 0 : i32
    %c0_i32_2 = arith.constant 0 : i32
    return %c0_i32, %c0_i32_0, %c0_i32_1 : i32, i32, i32
  }
  func.func @transform_9(%arg0: i32, %arg1: i32) -> (i32, i32) {
    %c0_i32 = arith.constant 0 : i32
    %c0_i32_0 = arith.constant 0 : i32
    %c0_i32_1 = arith.constant 0 : i32
    return %c0_i32, %c0_i32_0 : i32, i32
  }
  func.func @transform_10(%arg0: i32, %arg1: i32) -> (i32, i32) {
    %c0_i32 = arith.constant 0 : i32
    %c0_i32_0 = arith.constant 0 : i32
    %c0_i32_1 = arith.constant 0 : i32
    return %c0_i32, %c0_i32_0 : i32, i32
  }
  func.func @transform_11(%arg0: i32, %arg1: i32) -> (i32, i32) {
    %c0_i32 = arith.constant 0 : i32
    %c0_i32_0 = arith.constant 0 : i32
    %c0_i32_1 = arith.constant 0 : i32
    return %c0_i32, %c0_i32_0 : i32, i32
  }
  func.func @transform_12(%arg0: i32, %arg1: i32) -> (i32, i32) {
    %c0_i32 = arith.constant 0 : i32
    %c0_i32_0 = arith.constant 0 : i32
    %c0_i32_1 = arith.constant 0 : i32
    return %c0_i32, %c0_i32_0 : i32, i32
  }
  func.func @transform_13(%arg0: i32, %arg1: i32) -> (i32, i32) {
    %c0_i32 = arith.constant 0 : i32
    %c0_i32_0 = arith.constant 0 : i32
    %c0_i32_1 = arith.constant 0 : i32
    return %c0_i32, %c0_i32_0 : i32, i32
  }
  func.func @transform_14(%arg0: i32, %arg1: i32) -> (i32, i32) {
    %c0_i32 = arith.constant 0 : i32
    %c0_i32_0 = arith.constant 0 : i32
    %c0_i32_1 = arith.constant 0 : i32
    return %c0_i32, %c0_i32_0 : i32, i32
  }
  func.func @transform_15(%arg0: i32, %arg1: i32) -> (i32, i32) {
    %c0_i32 = arith.constant 0 : i32
    %c0_i32_0 = arith.constant 0 : i32
    %c0_i32_1 = arith.constant 0 : i32
    return %c0_i32, %c0_i32_0 : i32, i32
  }
  func.func @transform_16(%arg0: i32, %arg1: i32) -> (i32, i32) {
    %c0_i32 = arith.constant 0 : i32
    %c0_i32_0 = arith.constant 0 : i32
    %c0_i32_1 = arith.constant 0 : i32
    return %c0_i32, %c0_i32_0 : i32, i32
  }
  func.func @transform_17(%arg0: i32, %arg1: i32) -> (i32, i32) {
    %c0_i32 = arith.constant 0 : i32
    %c0_i32_0 = arith.constant 0 : i32
    %c0_i32_1 = arith.constant 0 : i32
    return %c0_i32, %c0_i32_0 : i32, i32
  }
  func.func @transform_18(%arg0: i32, %arg1: i32) -> (i32, i32, i32) {
    %c0_i32 = arith.constant 0 : i32
    %c0_i32_0 = arith.constant 0 : i32
    %c0_i32_1 = arith.constant 0 : i32
    return %arg0, %c0_i32, %c0_i32_0 : i32, i32, i32
  }
}

</mosaic_0001>

<llo_original>
// kernel: tpu_custom_call.1
$region0: #{tpu_custom_call.1}
  #allocation0 [shape = 'u32[]', space=smem, size = 0x4, offset = 0x4, fixed_abs, tag = 'smem constant byte address 0x4 - core index']
  #allocation1 [shape = 'u32[144,128]{1,0:T(1,128)}', space=vmem, size = 0x12000, scoped, tag = 'internal scratch']
  #allocation2 [shape = 'f32[32,128]{1,0:T(8,128)}', space=vmem, size = 0x4000, scoped, tag = 'scratch operand']
  #allocation3 [shape = 'bf16[32,128]{1,0:T(8,128)(2,1)}', space=vmem, size = 0x2000, scoped, tag = 'scratch operand']
  %s0 = inlined_call_operand.vmem [shape: f32[2,32,128], index: 0, kind: input, shape index: {}]
  %s1 = inlined_call_operand.vmem [shape: bf16[2,4,32,32], index: 1, kind: input, shape index: {}]
  %s2 = inlined_call_operand.vmem [shape: bf16[4,128,32], index: 2, kind: input, shape index: {}]
  %s3 = inlined_call_operand.vmem [shape: f32[4,1,32], index: 3, kind: input, shape index: {}]
  %s4 = inlined_call_operand.vmem [shape: bf16[4,128,32], index: 4, kind: input, shape index: {}]
  %s5 = inlined_call_operand.vmem [shape: f32[4,1,32], index: 5, kind: input, shape index: {}]
  %s6 = inlined_call_operand.vmem [shape: bf16[4,128,32], index: 6, kind: input, shape index: {}]
  %s7 = inlined_call_operand.vmem [shape: f32[4,1,32], index: 7, kind: input, shape index: {}]
  %s8 = inlined_call_operand.vmem [shape: bf16[4,32,128], index: 8, kind: input, shape index: {}]
  %s9 = inlined_call_operand.vmem [shape: f32[1,128], index: 9, kind: input, shape index: {}]
  %s10 = inlined_call_operand.vmem [shape: f32[1,128], index: 10, kind: input, shape index: {}]
  %s11 = inlined_call_operand.vmem [shape: f32[1,128], index: 11, kind: input, shape index: {}]
  %s12 = inlined_call_operand.vmem [shape: bf16[128,256], index: 12, kind: input, shape index: {}]
  %s13 = inlined_call_operand.vmem [shape: f32[1,256], index: 13, kind: input, shape index: {}]
  %s14 = inlined_call_operand.vmem [shape: bf16[256,128], index: 14, kind: input, shape index: {}]
  %s15 = inlined_call_operand.vmem [shape: f32[1,128], index: 15, kind: input, shape index: {}]
  %s16 = inlined_call_operand.vmem [shape: f32[1,128], index: 16, kind: input, shape index: {}]
  %s17 = inlined_call_operand.vmem [shape: f32[1,128], index: 17, kind: input, shape index: {}]
  %s18 = inlined_call_operand.hbm [shape: f32[2,32,128], index: 18, kind: output, shape index: {}]
  %s19 = sld [smem:[#allocation0]]
  $region113: #{tpu_custom_call.1} parent=0
    _
  %s21 = ssub.s32 1, %s19
  %s22 = scalar_select 0, %s21, %s19
  $region1: #{tpu_custom_call.1} parent=0
    #allocation4 [shape = 'u8[32768]{0}', space=vmem, size = 0x8000, scoped, tag = 'output window, operand 0']
    #allocation5 [shape = 's32[2]{0}', space=sflag, size = 0x8, scoped, tag = 'scoped memory for tpu_custom_call.1']
    %23 = vsyncpa [#allocation5], 0
    %s24 = scalar_lea.sflag [#allocation5], 1
    %25 = vsyncpa %s24, 0
    loop: start=0, step=1, limit=10
    $region2: #{tpu_custom_call.1} parent=1 // loop_pre_header
      _
    $region3: #{tpu_custom_call.1} parent=1 // loop_header
      %s27 = sphi 0, %s31
      %p28 = scmp.ge.s32.totalorder %s27, 10
      %s34 = sphi 0, %s46
      %s35 = sphi 0, %s42
      %s36 = sphi 0, %s34
      %s37 = sphi 0, %s35
      %s38 = sphi 0, %s36
      %s39 = sphi 0, %s37
      %s49 = sphi 0, %s51
      %s52 = sphi 0, %s49
      %s53 = sphi 0, %s52
      %s69 = sphi 0, %s53
      %s77 = sphi 0, %s79
      %s80 = sphi 0, %s77
      %s81 = sphi 0, %s80
      %s97 = sphi 0, %s81
      %s101 = sphi 0, %s101
      %s103 = sphi 0, %s101
      %s104 = sphi 0, %s103
      %s118 = sphi 0, %s104
      %s122 = sphi 0, %s122
      %s124 = sphi 0, %s122
      %s125 = sphi 0, %s124
      %s139 = sphi 0, %s125
      %s143 = sphi 0, %s143
      %s145 = sphi 0, %s143
      %s146 = sphi 0, %s145
      %s160 = sphi 0, %s146
      %s164 = sphi 0, %s164
      %s166 = sphi 0, %s164
      %s167 = sphi 0, %s166
      %s181 = sphi 0, %s167
      %s185 = sphi 0, %s185
      %s187 = sphi 0, %s185
      %s188 = sphi 0, %s187
      %s202 = sphi 0, %s188
      %s206 = sphi 0, %s206
      %s208 = sphi 0, %s206
      %s209 = sphi 0, %s208
      %s223 = sphi 0, %s209
      %s227 = sphi 0, %s227
      %s229 = sphi 0, %s227
      %s230 = sphi 0, %s229
      %s244 = sphi 0, %s230
      %s248 = sphi 0, %s248
      %s250 = sphi 0, %s248
      %s251 = sphi 0, %s250
      %s265 = sphi 0, %s251
      %s269 = sphi 0, %s269
      %s271 = sphi 0, %s269
      %s272 = sphi 0, %s271
      %s286 = sphi 0, %s272
      %s290 = sphi 0, %s290
      %s292 = sphi 0, %s290
      %s293 = sphi 0, %s292
      %s307 = sphi 0, %s293
      %s311 = sphi 0, %s311
      %s313 = sphi 0, %s311
      %s314 = sphi 0, %s313
      %s328 = sphi 0, %s314
      %s332 = sphi 0, %s332
      %s334 = sphi 0, %s332
      %s335 = sphi 0, %s334
      %s349 = sphi 0, %s335
      %s353 = sphi 0, %s353
      %s355 = sphi 0, %s353
      %s356 = sphi 0, %s355
      %s370 = sphi 0, %s356
      %s374 = sphi 0, %s374
      %s376 = sphi 0, %s374
      %s377 = sphi 0, %s376
      %s391 = sphi 0, %s377
      %s395 = sphi 0, %s395
      %s397 = sphi 0, %s395
      %s398 = sphi 0, %s397
      %s412 = sphi 0, %s398
      %s416 = sphi 0, %s416
      %s418 = sphi 0, %s416
      %s419 = sphi 0, %s418
      %s433 = sphi 0, %s419
      %s439 = sphi 0, %s441
      %s442 = sphi 0, %s439
      %s443 = sphi 0, %s442
      %s459 = sphi 0, %s443
    $region4: #{tpu_custom_call.1} parent=1 // loop_header_branch
      %30 = sbr.rel (%p28) target = $region8
    $region5: #{tpu_custom_call.1} parent=1 // loop_body
      %s32 = ssub.s32 %s27, 1
      %s33 = ssub.s32 %s27, 2
      %s40 = sadd.s32 1, %s35
      %p41 = scmp.ge.s32.totalorder %s40, 4
      %s42 = scalar_select %p41, 0, %s40
      %s43 = sadd.s32 1, %s34
      %s44 = scalar_select %p41, %s43, %s34
      %p45 = scmp.ge.s32.totalorder %s44, 2
      %s46 = scalar_select %p45, 0, %s44
      %s47 = ssub.s32 %s34, %s46
      %p48 = scmp.eq.s32.totalorder %s47, 0
      %s50 = sadd.s32 %s49, 1
      %s51 = scalar_select %p48, %s49, %s50
      %p54 = pneg %p48
      %p55 = scmp.eq.s32.totalorder %s27, 7
      %p56 = por %p54, %p55
      %p57 = scmp.ne.s32.totalorder %s49, %s52
      %p58 = scmp.eq.s32.totalorder %s27, 0
      %p59 = por %p57, %p58
      %p60 = scmp.ne.s32.totalorder %s49, %s52
      %p61 = scmp.eq.s32.totalorder %s32, 7
      %p62 = por %p60, %p61
      %p63 = scmp.ne.s32.totalorder %s52, %s53
      %p64 = scmp.eq.s32.totalorder %s32, 0
      %p65 = por %p63, %p64
      %p66 = scmp.ne.s32.totalorder %s52, %s53
      %p67 = scmp.eq.s32.totalorder %s33, 7
      %p68 = por %p66, %p67
      %p70 = scmp.ne.s32.totalorder %s53, %s69
      %p71 = scmp.eq.s32.totalorder %s33, 0
      %p72 = por %p70, %p71
      %s73 = ssub.s32 %s34, %s46
      %s74 = ssub.s32 %s35, %s42
      %s75 = sor.u32 %s73, %s74
      %p76 = scmp.eq.s32.totalorder %s75, 0
      %s78 = sadd.s32 %s77, 1
      %s79 = scalar_select %p76, %s77, %s78
      %p82 = pneg %p76
      %p83 = scmp.eq.s32.totalorder %s27, 7
      %p84 = por %p82, %p83
      %p85 = scmp.ne.s32.totalorder %s77, %s80
      %p86 = scmp.eq.s32.totalorder %s27, 0
      %p87 = por %p85, %p86
      %p88 = scmp.ne.s32.totalorder %s77, %s80
      %p89 = scmp.eq.s32.totalorder %s32, 7
      %p90 = por %p88, %p89
      %p91 = scmp.ne.s32.totalorder %s80, %s81
      %p92 = scmp.eq.s32.totalorder %s32, 0
      %p93 = por %p91, %p92
      %p94 = scmp.ne.s32.totalorder %s80, %s81
      %p95 = scmp.eq.s32.totalorder %s33, 7
      %p96 = por %p94, %p95
      %p98 = scmp.ne.s32.totalorder %s81, %s97
      %p99 = scmp.eq.s32.totalorder %s33, 0
      %p100 = por %p98, %p99
      %s102 = sadd.s32 %s101, 1
      %p105 = scmp.eq.s32.totalorder %s27, 7
      %p106 = scmp.ne.s32.totalorder %s101, %s103
      %p107 = scmp.eq.s32.totalorder %s27, 0
      %p108 = por %p106, %p107
      %p109 = scmp.ne.s32.totalorder %s101, %s103
      %p110 = scmp.eq.s32.totalorder %s32, 7
      %p111 = por %p109, %p110
      %p112 = scmp.ne.s32.totalorder %s103, %s104
      %p113 = scmp.eq.s32.totalorder %s32, 0
      %p114 = por %p112, %p113
      %p115 = scmp.ne.s32.totalorder %s103, %s104
      %p116 = scmp.eq.s32.totalorder %s33, 7
      %p117 = por %p115, %p116
      %p119 = scmp.ne.s32.totalorder %s104, %s118
      %p120 = scmp.eq.s32.totalorder %s33, 0
      %p121 = por %p119, %p120
      %s123 = sadd.s32 %s122, 1
      %p126 = scmp.eq.s32.totalorder %s27, 7
      %p127 = scmp.ne.s32.totalorder %s122, %s124
      %p128 = scmp.eq.s32.totalorder %s27, 0
      %p129 = por %p127, %p128
      %p130 = scmp.ne.s32.totalorder %s122, %s124
      %p131 = scmp.eq.s32.totalorder %s32, 7
      %p132 = por %p130, %p131
      %p133 = scmp.ne.s32.totalorder %s124, %s125
      %p134 = scmp.eq.s32.totalorder %s32, 0
      %p135 = por %p133, %p134
      %p136 = scmp.ne.s32.totalorder %s124, %s125
      %p137 = scmp.eq.s32.totalorder %s33, 7
      %p138 = por %p136, %p137
      %p140 = scmp.ne.s32.totalorder %s125, %s139
      %p141 = scmp.eq.s32.totalorder %s33, 0
      %p142 = por %p140, %p141
      %s144 = sadd.s32 %s143, 1
      %p147 = scmp.eq.s32.totalorder %s27, 7
      %p148 = scmp.ne.s32.totalorder %s143, %s145
      %p149 = scmp.eq.s32.totalorder %s27, 0
      %p150 = por %p148, %p149
      %p151 = scmp.ne.s32.totalorder %s143, %s145
      %p152 = scmp.eq.s32.totalorder %s32, 7
      %p153 = por %p151, %p152
      %p154 = scmp.ne.s32.totalorder %s145, %s146
      %p155 = scmp.eq.s32.totalorder %s32, 0
      %p156 = por %p154, %p155
      %p157 = scmp.ne.s32.totalorder %s145, %s146
      %p158 = scmp.eq.s32.totalorder %s33, 7
      %p159 = por %p157, %p158
      %p161 = scmp.ne.s32.totalorder %s146, %s160
      %p162 = scmp.eq.s32.totalorder %s33, 0
      %p163 = por %p161, %p162
      %s165 = sadd.s32 %s164, 1
      %p168 = scmp.eq.s32.totalorder %s27, 7
      %p169 = scmp.ne.s32.totalorder %s164, %s166
      %p170 = scmp.eq.s32.totalorder %s27, 0
      %p171 = por %p169, %p170
      %p172 = scmp.ne.s32.totalorder %s164, %s166
      %p173 = scmp.eq.s32.totalorder %s32, 7
      %p174 = por %p172, %p173
      %p175 = scmp.ne.s32.totalorder %s166, %s167
      %p176 = scmp.eq.s32.totalorder %s32, 0
      %p177 = por %p175, %p176
      %p178 = scmp.ne.s32.totalorder %s166, %s167
      %p179 = scmp.eq.s32.totalorder %s33, 7
      %p180 = por %p178, %p179
      %p182 = scmp.ne.s32.totalorder %s167, %s181
      %p183 = scmp.eq.s32.totalorder %s33, 0
      %p184 = por %p182, %p183
      %s186 = sadd.s32 %s185, 1
      %p189 = scmp.eq.s32.totalorder %s27, 7
      %p190 = scmp.ne.s32.totalorder %s185, %s187
      %p191 = scmp.eq.s32.totalorder %s27, 0
      %p192 = por %p190, %p191
      %p193 = scmp.ne.s32.totalorder %s185, %s187
      %p194 = scmp.eq.s32.totalorder %s32, 7
      %p195 = por %p193, %p194
      %p196 = scmp.ne.s32.totalorder %s187, %s188
      %p197 = scmp.eq.s32.totalorder %s32, 0
      %p198 = por %p196, %p197
      %p199 = scmp.ne.s32.totalorder %s187, %s188
      %p200 = scmp.eq.s32.totalorder %s33, 7
      %p201 = por %p199, %p200
      %p203 = scmp.ne.s32.totalorder %s188, %s202
      %p204 = scmp.eq.s32.totalorder %s33, 0
      %p205 = por %p203, %p204
      %s207 = sadd.s32 %s206, 1
      %p210 = scmp.eq.s32.totalorder %s27, 7
      %p211 = scmp.ne.s32.totalorder %s206, %s208
      %p212 = scmp.eq.s32.totalorder %s27, 0
      %p213 = por %p211, %p212
      %p214 = scmp.ne.s32.totalorder %s206, %s208
      %p215 = scmp.eq.s32.totalorder %s32, 7
      %p216 = por %p214, %p215
      %p217 = scmp.ne.s32.totalorder %s208, %s209
      %p218 = scmp.eq.s32.totalorder %s32, 0
      %p219 = por %p217, %p218
      %p220 = scmp.ne.s32.totalorder %s208, %s209
      %p221 = scmp.eq.s32.totalorder %s33, 7
      %p222 = por %p220, %p221
      %p224 = scmp.ne.s32.totalorder %s209, %s223
      %p225 = scmp.eq.s32.totalorder %s33, 0
      %p226 = por %p224, %p225
      %s228 = sadd.s32 %s227, 1
      %p231 = scmp.eq.s32.totalorder %s27, 7
      %p232 = scmp.ne.s32.totalorder %s227, %s229
      %p233 = scmp.eq.s32.totalorder %s27, 0
      %p234 = por %p232, %p233
      %p235 = scmp.ne.s32.totalorder %s227, %s229
      %p236 = scmp.eq.s32.totalorder %s32, 7
      %p237 = por %p235, %p236
      %p238 = scmp.ne.s32.totalorder %s229, %s230
      %p239 = scmp.eq.s32.totalorder %s32, 0
      %p240 = por %p238, %p239
      %p241 = scmp.ne.s32.totalorder %s229, %s230
      %p242 = scmp.eq.s32.totalorder %s33, 7
      %p243 = por %p241, %p242
      %p245 = scmp.ne.s32.totalorder %s230, %s244
      %p246 = scmp.eq.s32.totalorder %s33, 0
      %p247 = por %p245, %p246
      %s249 = sadd.s32 %s248, 1
      %p252 = scmp.eq.s32.totalorder %s27, 7
      %p253 = scmp.ne.s32.totalorder %s248, %s250
      %p254 = scmp.eq.s32.totalorder %s27, 0
      %p255 = por %p253, %p254
      %p256 = scmp.ne.s32.totalorder %s248, %s250
      %p257 = scmp.eq.s32.totalorder %s32, 7
      %p258 = por %p256, %p257
      %p259 = scmp.ne.s32.totalorder %s250, %s251
      %p260 = scmp.eq.s32.totalorder %s32, 0
      %p261 = por %p259, %p260
      %p262 = scmp.ne.s32.totalorder %s250, %s251
      %p263 = scmp.eq.s32.totalorder %s33, 7
      %p264 = por %p262, %p263
      %p266 = scmp.ne.s32.totalorder %s251, %s265
      %p267 = scmp.eq.s32.totalorder %s33, 0
      %p268 = por %p266, %p267
      %s270 = sadd.s32 %s269, 1
      %p273 = scmp.eq.s32.totalorder %s27, 7
      %p274 = scmp.ne.s32.totalorder %s269, %s271
      %p275 = scmp.eq.s32.totalorder %s27, 0
      %p276 = por %p274, %p275
      %p277 = scmp.ne.s32.totalorder %s269, %s271
      %p278 = scmp.eq.s32.totalorder %s32, 7
      %p279 = por %p277, %p278
      %p280 = scmp.ne.s32.totalorder %s271, %s272
      %p281 = scmp.eq.s32.totalorder %s32, 0
      %p282 = por %p280, %p281
      %p283 = scmp.ne.s32.totalorder %s271, %s272
      %p284 = scmp.eq.s32.totalorder %s33, 7
      %p285 = por %p283, %p284
      %p287 = scmp.ne.s32.totalorder %s272, %s286
      %p288 = scmp.eq.s32.totalorder %s33, 0
      %p289 = por %p287, %p288
      %s291 = sadd.s32 %s290, 1
      %p294 = scmp.eq.s32.totalorder %s27, 7
      %p295 = scmp.ne.s32.totalorder %s290, %s292
      %p296 = scmp.eq.s32.totalorder %s27, 0
      %p297 = por %p295, %p296
      %p298 = scmp.ne.s32.totalorder %s290, %s292
      %p299 = scmp.eq.s32.totalorder %s32, 7
      %p300 = por %p298, %p299
      %p301 = scmp.ne.s32.totalorder %s292, %s293
      %p302 = scmp.eq.s32.totalorder %s32, 0
      %p303 = por %p301, %p302
      %p304 = scmp.ne.s32.totalorder %s292, %s293
      %p305 = scmp.eq.s32.totalorder %s33, 7
      %p306 = por %p304, %p305
      %p308 = scmp.ne.s32.totalorder %s293, %s307
      %p309 = scmp.eq.s32.totalorder %s33, 0
      %p310 = por %p308, %p309
      %s312 = sadd.s32 %s311, 1
      %p315 = scmp.eq.s32.totalorder %s27, 7
      %p316 = scmp.ne.s32.totalorder %s311, %s313
      %p317 = scmp.eq.s32.totalorder %s27, 0
      %p318 = por %p316, %p317
      %p319 = scmp.ne.s32.totalorder %s311, %s313
      %p320 = scmp.eq.s32.totalorder %s32, 7
      %p321 = por %p319, %p320
      %p322 = scmp.ne.s32.totalorder %s313, %s314
      %p323 = scmp.eq.s32.totalorder %s32, 0
      %p324 = por %p322, %p323
      %p325 = scmp.ne.s32.totalorder %s313, %s314
      %p326 = scmp.eq.s32.totalorder %s33, 7
      %p327 = por %p325, %p326
      %p329 = scmp.ne.s32.totalorder %s314, %s328
      %p330 = scmp.eq.s32.totalorder %s33, 0
      %p331 = por %p329, %p330
      %s333 = sadd.s32 %s332, 1
      %p336 = scmp.eq.s32.totalorder %s27, 7
      %p337 = scmp.ne.s32.totalorder %s332, %s334
      %p338 = scmp.eq.s32.totalorder %s27, 0
      %p339 = por %p337, %p338
      %p340 = scmp.ne.s32.totalorder %s332, %s334
      %p341 = scmp.eq.s32.totalorder %s32, 7
      %p342 = por %p340, %p341
      %p343 = scmp.ne.s32.totalorder %s334, %s335
      %p344 = scmp.eq.s32.totalorder %s32, 0
      %p345 = por %p343, %p344
      %p346 = scmp.ne.s32.totalorder %s334, %s335
      %p347 = scmp.eq.s32.totalorder %s33, 7
      %p348 = por %p346, %p347
      %p350 = scmp.ne.s32.totalorder %s335, %s349
      %p351 = scmp.eq.s32.totalorder %s33, 0
      %p352 = por %p350, %p351
      %s354 = sadd.s32 %s353, 1
      %p357 = scmp.eq.s32.totalorder %s27, 7
      %p358 = scmp.ne.s32.totalorder %s353, %s355
      %p359 = scmp.eq.s32.totalorder %s27, 0
      %p360 = por %p358, %p359
      %p361 = scmp.ne.s32.totalorder %s353, %s355
      %p362 = scmp.eq.s32.totalorder %s32, 7
      %p363 = por %p361, %p362
      %p364 = scmp.ne.s32.totalorder %s355, %s356
      %p365 = scmp.eq.s32.totalorder %s32, 0
      %p366 = por %p364, %p365
      %p367 = scmp.ne.s32.totalorder %s355, %s356
      %p368 = scmp.eq.s32.totalorder %s33, 7
      %p369 = por %p367, %p368
      %p371 = scmp.ne.s32.totalorder %s356, %s370
      %p372 = scmp.eq.s32.totalorder %s33, 0
      %p373 = por %p371, %p372
      %s375 = sadd.s32 %s374, 1
      %p378 = scmp.eq.s32.totalorder %s27, 7
      %p379 = scmp.ne.s32.totalorder %s374, %s376
      %p380 = scmp.eq.s32.totalorder %s27, 0
      %p381 = por %p379, %p380
      %p382 = scmp.ne.s32.totalorder %s374, %s376
      %p383 = scmp.eq.s32.totalorder %s32, 7
      %p384 = por %p382, %p383
      %p385 = scmp.ne.s32.totalorder %s376, %s377
      %p386 = scmp.eq.s32.totalorder %s32, 0
      %p387 = por %p385, %p386
      %p388 = scmp.ne.s32.totalorder %s376, %s377
      %p389 = scmp.eq.s32.totalorder %s33, 7
      %p390 = por %p388, %p389
      %p392 = scmp.ne.s32.totalorder %s377, %s391
      %p393 = scmp.eq.s32.totalorder %s33, 0
      %p394 = por %p392, %p393
      %s396 = sadd.s32 %s395, 1
      %p399 = scmp.eq.s32.totalorder %s27, 7
      %p400 = scmp.ne.s32.totalorder %s395, %s397
      %p401 = scmp.eq.s32.totalorder %s27, 0
      %p402 = por %p400, %p401
      %p403 = scmp.ne.s32.totalorder %s395, %s397
      %p404 = scmp.eq.s32.totalorder %s32, 7
      %p405 = por %p403, %p404
      %p406 = scmp.ne.s32.totalorder %s397, %s398
      %p407 = scmp.eq.s32.totalorder %s32, 0
      %p408 = por %p406, %p407
      %p409 = scmp.ne.s32.totalorder %s397, %s398
      %p410 = scmp.eq.s32.totalorder %s33, 7
      %p411 = por %p409, %p410
      %p413 = scmp.ne.s32.totalorder %s398, %s412
      %p414 = scmp.eq.s32.totalorder %s33, 0
      %p415 = por %p413, %p414
      %s417 = sadd.s32 %s416, 1
      %p420 = scmp.eq.s32.totalorder %s27, 7
      %p421 = scmp.ne.s32.totalorder %s416, %s418
      %p422 = scmp.eq.s32.totalorder %s27, 0
      %p423 = por %p421, %p422
      %p424 = scmp.ne.s32.totalorder %s416, %s418
      %p425 = scmp.eq.s32.totalorder %s32, 7
      %p426 = por %p424, %p425
      %p427 = scmp.ne.s32.totalorder %s418, %s419
      %p428 = scmp.eq.s32.totalorder %s32, 0
      %p429 = por %p427, %p428
      %p430 = scmp.ne.s32.totalorder %s418, %s419
      %p431 = scmp.eq.s32.totalorder %s33, 7
      %p432 = por %p430, %p431
      %p434 = scmp.ne.s32.totalorder %s419, %s433
      %p435 = scmp.eq.s32.totalorder %s33, 0
      %p436 = por %p434, %p435
      %s437 = ssub.s32 %s34, %s46
      %p438 = scmp.eq.s32.totalorder %s437, 0
      %s440 = sadd.s32 %s439, 1
      %s441 = scalar_select %p438, %s439, %s440
      %p444 = pneg %p438
      %p445 = scmp.eq.s32.totalorder %s27, 7
      %p446 = por %p444, %p445
      %p447 = scmp.ne.s32.totalorder %s439, %s442
      %p448 = scmp.eq.s32.totalorder %s27, 0
      %p449 = por %p447, %p448
      %p450 = scmp.ne.s32.totalorder %s439, %s442
      %p451 = scmp.eq.s32.totalorder %s32, 7
      %p452 = por %p450, %p451
      %p453 = scmp.ne.s32.totalorder %s442, %s443
      %p454 = scmp.eq.s32.totalorder %s32, 0
      %p455 = por %p453, %p454
      %p456 = scmp.ne.s32.totalorder %s442, %s443
      %p457 = scmp.eq.s32.totalorder %s33, 7
      %p458 = por %p456, %p457
      %p460 = scmp.ne.s32.totalorder %s443, %s459
      %p461 = scmp.eq.s32.totalorder %s33, 0
      %p462 = por %p460, %p461
      %p463 = scmp.le.s32.totalorder 1, %s27
      %p464 = scmp.lt.s32.totalorder %s27, 9
      %p465 = pnand %p463, %p464
      %p466 = pneg %p465
      // Predicated region
      $region9: #{tpu_custom_call.1} parent=5 // pred_check
        _
      $region10: #{tpu_custom_call.1} parent=5 // pred_check_branch
        %468 = sbr.rel (%p465) target = $region12
      $region11: #{tpu_custom_call.1} parent=5 // pred_region
        %s469 = ssub.s32 %s27, 1
        // Predicated region
        $region13: #{tpu_custom_call.1} parent=11 // pred_check
          %p470 = pneg %p114
        $region14: #{tpu_custom_call.1} parent=11 // pred_check_branch
          %472 = sbr.rel (%p470) target = $region16
        $region15: #{tpu_custom_call.1} parent=11 // pred_region
          _
        $region16: #{tpu_custom_call.1} parent=11 // pred_fallthru
          _
        // Predicated region
        $region17: #{tpu_custom_call.1} parent=11 // pred_check
          %p473 = pneg %p135
        $region18: #{tpu_custom_call.1} parent=11 // pred_check_branch
          %475 = sbr.rel (%p473) target = $region20
        $region19: #{tpu_custom_call.1} parent=11 // pred_region
          _
        $region20: #{tpu_custom_call.1} parent=11 // pred_fallthru
          _
        // Predicated region
        $region21: #{tpu_custom_call.1} parent=11 // pred_check
          %p476 = pneg %p156
        $region22: #{tpu_custom_call.1} parent=11 // pred_check_branch
          %478 = sbr.rel (%p476) target = $region24
        $region23: #{tpu_custom_call.1} parent=11 // pred_region
          _
        $region24: #{tpu_custom_call.1} parent=11 // pred_fallthru
          _
        // Predicated region
        $region25: #{tpu_custom_call.1} parent=11 // pred_check
          %p479 = pneg %p177
        $region26: #{tpu_custom_call.1} parent=11 // pred_check_branch
          %481 = sbr.rel (%p479) target = $region28
        $region27: #{tpu_custom_call.1} parent=11 // pred_region
          _
        $region28: #{tpu_custom_call.1} parent=11 // pred_fallthru
          _
        // Predicated region
        $region29: #{tpu_custom_call.1} parent=11 // pred_check
          %p482 = pneg %p198
        $region30: #{tpu_custom_call.1} parent=11 // pred_check_branch
          %484 = sbr.rel (%p482) target = $region32
        $region31: #{tpu_custom_call.1} parent=11 // pred_region
          _
        $region32: #{tpu_custom_call.1} parent=11 // pred_fallthru
          _
        // Predicated region
        $region33: #{tpu_custom_call.1} parent=11 // pred_check
          %p485 = pneg %p219
        $region34: #{tpu_custom_call.1} parent=11 // pred_check_branch
          %487 = sbr.rel (%p485) target = $region36
        $region35: #{tpu_custom_call.1} parent=11 // pred_region
          _
        $region36: #{tpu_custom_call.1} parent=11 // pred_fallthru
          _
        // Predicated region
        $region37: #{tpu_custom_call.1} parent=11 // pred_check
          %p488 = pneg %p240
        $region38: #{tpu_custom_call.1} parent=11 // pred_check_branch
          %490 = sbr.rel (%p488) target = $region40
        $region39: #{tpu_custom_call.1} parent=11 // pred_region
          _
        $region40: #{tpu_custom_call.1} parent=11 // pred_fallthru
          _
        // Predicated region
        $region41: #{tpu_custom_call.1} parent=11 // pred_check
          %p491 = pneg %p261
        $region42: #{tpu_custom_call.1} parent=11 // pred_check_branch
          %493 = sbr.rel (%p491) target = $region44
        $region43: #{tpu_custom_call.1} parent=11 // pred_region
          _
        $region44: #{tpu_custom_call.1} parent=11 // pred_fallthru
          _
        // Predicated region
        $region45: #{tpu_custom_call.1} parent=11 // pred_check
          %p494 = pneg %p282
        $region46: #{tpu_custom_call.1} parent=11 // pred_check_branch
          %496 = sbr.rel (%p494) target = $region48
        $region47: #{tpu_custom_call.1} parent=11 // pred_region
          _
        $region48: #{tpu_custom_call.1} parent=11 // pred_fallthru
          _
        // Predicated region
        $region49: #{tpu_custom_call.1} parent=11 // pred_check
          %p497 = pneg %p303
        $region50: #{tpu_custom_call.1} parent=11 // pred_check_branch
          %499 = sbr.rel (%p497) target = $region52
        $region51: #{tpu_custom_call.1} parent=11 // pred_region
          _
        $region52: #{tpu_custom_call.1} parent=11 // pred_fallthru
          _
        // Predicated region
        $region53: #{tpu_custom_call.1} parent=11 // pred_check
          %p500 = pneg %p324
        $region54: #{tpu_custom_call.1} parent=11 // pred_check_branch
          %502 = sbr.rel (%p500) target = $region56
        $region55: #{tpu_custom_call.1} parent=11 // pred_region
          _
        $region56: #{tpu_custom_call.1} parent=11 // pred_fallthru
          _
        // Predicated region
        $region57: #{tpu_custom_call.1} parent=11 // pred_check
          %p503 = pneg %p345
        $region58: #{tpu_custom_call.1} parent=11 // pred_check_branch
          %505 = sbr.rel (%p503) target = $region60
        $region59: #{tpu_custom_call.1} parent=11 // pred_region
          _
        $region60: #{tpu_custom_call.1} parent=11 // pred_fallthru
          _
        // Predicated region
        $region61: #{tpu_custom_call.1} parent=11 // pred_check
          %p506 = pneg %p366
        $region62: #{tpu_custom_call.1} parent=11 // pred_check_branch
          %508 = sbr.rel (%p506) target = $region64
        $region63: #{tpu_custom_call.1} parent=11 // pred_region
          _
        $region64: #{tpu_custom_call.1} parent=11 // pred_fallthru
          _
        // Predicated region
        $region65: #{tpu_custom_call.1} parent=11 // pred_check
          %p509 = pneg %p387
        $region66: #{tpu_custom_call.1} parent=11 // pred_check_branch
          %511 = sbr.rel (%p509) target = $region68
        $region67: #{tpu_custom_call.1} parent=11 // pred_region
          _
        $region68: #{tpu_custom_call.1} parent=11 // pred_fallthru
          _
        // Predicated region
        $region69: #{tpu_custom_call.1} parent=11 // pred_check
          %p512 = pneg %p408
        $region70: #{tpu_custom_call.1} parent=11 // pred_check_branch
          %514 = sbr.rel (%p512) target = $region72
        $region71: #{tpu_custom_call.1} parent=11 // pred_region
          _
        $region72: #{tpu_custom_call.1} parent=11 // pred_fallthru
          _
        // Predicated region
        $region73: #{tpu_custom_call.1} parent=11 // pred_check
          %p515 = pneg %p429
        $region74: #{tpu_custom_call.1} parent=11 // pred_check_branch
          %517 = sbr.rel (%p515) target = $region76
        $region75: #{tpu_custom_call.1} parent=11 // pred_region
          _
        $region76: #{tpu_custom_call.1} parent=11 // pred_fallthru
          _
      $region12: #{tpu_custom_call.1} parent=5 // pred_fallthru
        _
      %p518 = scmp.lt.s32.totalorder %s27, 8
      // Predicated region
      $region77: #{tpu_custom_call.1} parent=5 // pred_check
        %p519 = pneg %p518
      $region78: #{tpu_custom_call.1} parent=5 // pred_check_branch
        %521 = sbr.rel (%p519) target = $region80
      $region79: #{tpu_custom_call.1} parent=5 // pred_region
        // Predicated region
        $region81: #{tpu_custom_call.1} parent=79 // pred_check
          %p522 = pneg %p59
        $region82: #{tpu_custom_call.1} parent=79 // pred_check_branch
          %524 = sbr.rel (%p522) target = $region84
        $region83: #{tpu_custom_call.1} parent=79 // pred_region
          %p525 = scmp.lt.s32.totalorder %s34, 1
          %s526 = scalar_select %p525, %s34, 1
          %s527 = smul.addr %s526, 4
          %s528 = smul.addr %s527, 8
          %s529 = scalar_lea.vmem %s0, %s528
        $region84: #{tpu_custom_call.1} parent=79 // pred_fallthru
          _
        // Predicated region
        $region85: #{tpu_custom_call.1} parent=79 // pred_check
          %p530 = pneg %p87
        $region86: #{tpu_custom_call.1} parent=79 // pred_check_branch
          %532 = sbr.rel (%p530) target = $region88
        $region87: #{tpu_custom_call.1} parent=79 // pred_region
          %p533 = scmp.lt.s32.totalorder %s34, 1
          %s534 = scalar_select %p533, %s34, 1
          %p535 = scmp.lt.s32.totalorder %s35, 3
          %s536 = scalar_select %p535, %s35, 3
          %s537 = smul.addr %s536, 4
          %s538 = smul.addr %s534, 16
          %s539 = sadd.s32 %s537, %s538
          %s540 = smul.addr %s539, 4
          %s541 = scalar_lea.vmem %s1, %s540
        $region88: #{tpu_custom_call.1} parent=79 // pred_fallthru
          _
      $region80: #{tpu_custom_call.1} parent=5 // pred_fallthru
        _
      %p542 = scmp.le.s32.totalorder 1, %s27
      %p543 = scmp.lt.s32.totalorder %s27, 9
      %p544 = pnand %p542, %p543
      %p545 = pneg %p544
      // Predicated region
      $region89: #{tpu_custom_call.1} parent=5 // pred_check
        _
      $region90: #{tpu_custom_call.1} parent=5 // pred_check_branch
        %547 = sbr.rel (%p544) target = $region92
      $region91: #{tpu_custom_call.1} parent=5 // pred_region
        %s548 = ssub.s32 %s27, 1
        %p549 = scmp.lt.s32.totalorder %s36, 1
        %s550 = scalar_select %p549, %s36, 1
        %s551 = smul.addr %s550, 4
        %s552 = smul.addr %s551, 8
        %s553 = scalar_lea.vmem %s0, %s552
        %p554 = pneg %p65
        %p555 = pneg %p62
        %p556 = scmp.lt.s32.totalorder %s36, 1
        %s557 = scalar_select %p556, %s36, 1
        %p558 = scmp.lt.s32.totalorder %s37, 3
        %s559 = scalar_select %p558, %s37, 3
        %s560 = smul.addr %s559, 4
        %s561 = smul.addr %s557, 16
        %s562 = sadd.s32 %s560, %s561
        %s563 = smul.addr %s562, 4
        %s564 = scalar_lea.vmem %s1, %s563
        %p565 = pneg %p93
        %p566 = pneg %p90
        %p567 = pneg %p114
        %p568 = pneg %p111
        %p569 = pneg %p135
        %p570 = pneg %p132
        %p571 = pneg %p156
        %p572 = pneg %p153
        %p573 = pneg %p177
        %p574 = pneg %p174
        %p575 = pneg %p198
        %p576 = pneg %p195
        %p577 = pneg %p219
        %p578 = pneg %p216
        %p579 = pneg %p240
        %p580 = pneg %p237
        %p581 = pneg %p261
        %p582 = pneg %p258
        %p583 = pneg %p282
        %p584 = pneg %p279
        %p585 = pneg %p303
        %p586 = pneg %p300
        %p587 = pneg %p324
        %p588 = pneg %p321
        %p589 = pneg %p345
        %p590 = pneg %p342
        %p591 = pneg %p366
        %p592 = pneg %p363
        %p593 = pneg %p387
        %p594 = pneg %p384
        %p595 = pneg %p408
        %p596 = pneg %p405
        %p597 = pneg %p429
        %p598 = pneg %p426
        %p599 = pneg %p455
        %p600 = pneg %p452
        %s601 = sand.u32 %s442, 1
        %s602 = scalar_lea.sflag [#allocation5], %s601
        %s603 = sand.u32 %s442, 1
        %s604 = smul.addr %s603, 32
        %s605 = scalar_lea.vmem [#allocation4], %s604
        %p606 = scmp.lt.s32.totalorder %s36, 1
        %s607 = scalar_select %p606, %s36, 1
        %s608 = smul.addr %s607, 4
        %s609 = smul.addr %s608, 8
        %s610 = scalar_lea.vmem %s0, %s609
        %p611 = scmp.lt.s32.totalorder %s36, 1
        %s612 = scalar_select %p611, %s36, 1
        %p613 = scmp.lt.s32.totalorder %s37, 3
        %s614 = scalar_select %p613, %s37, 3
        %s615 = smul.addr %s614, 4
        %s616 = smul.addr %s612, 16
        %s617 = sadd.s32 %s615, %s616
        %s618 = smul.addr %s617, 4
        %s619 = scalar_lea.vmem %s1, %s618
        %p621 = scmp.eq.s32.totalorder %s37, 0
        // Predicated region
        $region93: #{tpu_custom_call.1} parent=91 // pred_check
          %p622 = pneg %p621
        $region94: #{tpu_custom_call.1} parent=91 // pred_check_branch
          %624 = sbr.rel (%p622) target = $region96
        $region95: #{tpu_custom_call.1} parent=91 // pred_region
          %625 = vst [vmem:[#allocation2] sm:$0xff] 0.0
          %626 = vst [vmem:[#allocation2 + $0x8] sm:$0xff] 0.0
          %627 = vst [vmem:[#allocation2 + $0x10] sm:$0xff] 0.0
          %628 = vst [vmem:[#allocation2 + $0x18] sm:$0xff] 0.0
          %v629 = vld [vmem:[%s610] sm:$0xff]
          %v630 = vld [vmem:[%s610 + $0x8] sm:$0xff]
          %v631 = vld [vmem:[%s610 + $0x10] sm:$0xff]
          %v632 = vld [vmem:[%s610 + $0x18] sm:$0xff]
          %v633 = vpack.c.bf16 %v630, %v629
          %v634 = vpack.c.bf16 %v632, %v631
          %v637 = vunpack.c.l.b16 %v633
          %v638 = vunpack.c.h.b16 %v633
          %v639 = vunpack.c.l.b16 %v634
          %v640 = vunpack.c.h.b16 %v634
          %v641 = vpack.c.b16 %v637, %v637
          %v642 = vpack.c.b16 %v638, %v638
          %v643 = vpack.c.b16 %v639, %v639
          %v644 = vpack.c.b16 %v640, %v640
          %649 = vst [vmem:[#allocation3] sm:$0xf] %v641
          %650 = vst [vmem:[#allocation3 + $0x4] sm:$0xf] %v642
          %651 = vst [vmem:[#allocation3 + $0x8] sm:$0xf] %v643
          %652 = vst [vmem:[#allocation3 + $0xc] sm:$0xf] %v644
        $region96: #{tpu_custom_call.1} parent=91 // pred_fallthru
          _
        %v653 = vld [vmem:[#allocation3] sm:$0xf]
        %v654 = vld [vmem:[#allocation3 + $0x4] sm:$0xf]
        %v655 = vld [vmem:[#allocation3 + $0x8] sm:$0xf]
        %v656 = vld [vmem:[#allocation3 + $0xc] sm:$0xf]
        %s657 = smul.u32 %s37, 16
        %s658 = smul.addr %s657, 4
        %s659 = scalar_lea.vmem %s2, %s658
        %v660 = vld [vmem:[%s659] sm:$0xf]
        %v661 = vld [vmem:[%s659 + $0x4] sm:$0xf]
        %v662 = vld [vmem:[%s659 + $0x8] sm:$0xf]
        %v663 = vld [vmem:[%s659 + $0xc] sm:$0xf]
        %v664 = vld [vmem:[%s659 + $0x10] sm:$0xf]
        %v665 = vld [vmem:[%s659 + $0x14] sm:$0xf]
        %v666 = vld [vmem:[%s659 + $0x18] sm:$0xf]
        %v667 = vld [vmem:[%s659 + $0x1c] sm:$0xf]
        %v668 = vld [vmem:[%s659 + $0x20] sm:$0xf]
        %v669 = vld [vmem:[%s659 + $0x24] sm:$0xf]
        %v670 = vld [vmem:[%s659 + $0x28] sm:$0xf]
        %v671 = vld [vmem:[%s659 + $0x2c] sm:$0xf]
        %v672 = vld [vmem:[%s659 + $0x30] sm:$0xf]
        %v673 = vld [vmem:[%s659 + $0x34] sm:$0xf]
        %v674 = vld [vmem:[%s659 + $0x38] sm:$0xf]
        %v675 = vld [vmem:[%s659 + $0x3c] sm:$0xf]
        %s676 = scalar_lea.vmem %s3, %s37
        %v677 = vld [vmem:[%s676] sm:$0x1]
        %v679 = vlaneseq
        %v680 = vshrl.u32 %v679, 7
        %v681 = vsub.s32 0, %v680
        %v682 = vrot.slane %v677, %v681
        %v688 = vunpack.c.l.b16 %v653
        %v689 = vunpack.c.l.b16 %v654
        %v690 = vunpack.c.l.b16 %v655
        %v691 = vunpack.c.l.b16 %v656
        %v692 = vpack.c.b16 %v689, %v688
        %v693 = vpack.c.b16 %v691, %v690
        %v712 = vunpack.c.l.b16 %v660
        %v713 = vunpack.c.l.b16 %v661
        %v714 = vunpack.c.l.b16 %v662
        %v715 = vunpack.c.l.b16 %v663
        %v716 = vunpack.c.l.b16 %v664
        %v717 = vunpack.c.l.b16 %v665
        %v718 = vunpack.c.l.b16 %v666
        %v719 = vunpack.c.l.b16 %v667
        %v720 = vunpack.c.l.b16 %v668
        %v721 = vunpack.c.l.b16 %v669
        %v722 = vunpack.c.l.b16 %v670
        %v723 = vunpack.c.l.b16 %v671
        %v724 = vunpack.c.l.b16 %v672
        %v725 = vunpack.c.l.b16 %v673
        %v726 = vunpack.c.l.b16 %v674
        %v727 = vunpack.c.l.b16 %v675
        %v728 = vpack.c.b16 %v713, %v712
        %v729 = vpack.c.b16 %v715, %v714
        %v730 = vpack.c.b16 %v717, %v716
        %v731 = vpack.c.b16 %v719, %v718
        %v732 = vpack.c.b16 %v721, %v720
        %v733 = vpack.c.b16 %v723, %v722
        %v734 = vpack.c.b16 %v725, %v724
        %v735 = vpack.c.b16 %v727, %v726
        %744 = vmatprep.subr.bf16.mxu0 0
        %745 = vmatpush1.bf16.msra.mxu0 %v735
        %746 = vmatprep.subr.bf16.mxu0 0
        %747 = vmatpush1.bf16.msra.mxu0 %v734
        %748 = vmatprep.subr.bf16.mxu0 0
        %749 = vmatpush1.bf16.msra.mxu0 %v733
        %750 = vmatprep.subr.bf16.mxu0 0
        %751 = vmatpush1.bf16.msra.mxu0 %v732
        %752 = vmatprep.subr.bf16.mxu0 0
        %753 = vmatpush1.bf16.msra.mxu0 %v731
        %754 = vmatprep.subr.bf16.mxu0 0
        %755 = vmatpush1.bf16.msra.mxu0 %v730
        %756 = vmatprep.subr.bf16.mxu0 0
        %757 = vmatpush1.bf16.msra.mxu0 %v729
        %758 = vmatprep.subr.bf16.mxu0 0
        %759 = vmatpush1.bf16.msra.mxu0 %v728
        %760 = vmatprep.subr.bf16.mxu0 0
        %761 = vmatpush2.bf16.msra.mxu0 0
        %762 = vmatprep.subr.bf16.mxu0 0
        %763 = vmatpush2.bf16.msra.mxu0 0
        %764 = vmatprep.subr.bf16.mxu0 0
        %765 = vmatpush2.bf16.msra.mxu0 0
        %766 = vmatprep.subr.bf16.mxu0 0
        %767 = vmatpush2.bf16.msra.mxu0 0
        %768 = vmatprep.subr.bf16.mxu0 0
        %769 = vmatpush2.bf16.msra.mxu0 0
        %770 = vmatprep.subr.bf16.mxu0 0
        %771 = vmatpush2.bf16.msra.mxu0 0
        %772 = vmatprep.subr.bf16.mxu0 0
        %773 = vmatpush2.bf16.msra.mxu0 0
        %774 = vmatprep.subr.bf16.mxu0 0
        %775 = vmatpush2.bf16.msra.mxu0 0
        %776 = vmatprep.mubr.bf16.mxu0 0
        %777 = vmatmul.mubr.bf16.gmra.mxu0 %v692
        %v778 = vpop.f32.mrf.mxu0
        %v779 = vadd.f32 %v682, %v778
        %v780 = vpop.f32.mrf.mxu0
        %v781 = vpop.f32.mrf.mxu0
        %v782 = vadd.f32 %v682, %v781
        %v783 = vpop.f32.mrf.mxu0
        %784 = vmatprep.mubr.bf16.mxu0 0
        %785 = vmatmul.mubr.bf16.gmra.mxu0 %v693
        %v786 = vpop.f32.mrf.mxu0
        %v787 = vadd.f32 %v682, %v786
        %v788 = vpop.f32.mrf.mxu0
        %v789 = vpop.f32.mrf.mxu0
        %v790 = vadd.f32 %v682, %v789
        %v791 = vpop.f32.mrf.mxu0
        %792 = vdwg.mxu0
        %v793 = vmul.f32 %v779, 0.17677669
        %v794 = vmul.f32 %v782, 0.17677669
        %v795 = vmul.f32 %v787, 0.17677669
        %v796 = vmul.f32 %v790, 0.17677669
        %s797 = smul.addr %s657, 4
        %s798 = scalar_lea.vmem %s4, %s797
        %v799 = vld [vmem:[%s798] sm:$0xf]
        %v800 = vld [vmem:[%s798 + $0x4] sm:$0xf]
        %v801 = vld [vmem:[%s798 + $0x8] sm:$0xf]
        %v802 = vld [vmem:[%s798 + $0xc] sm:$0xf]
        %v803 = vld [vmem:[%s798 + $0x10] sm:$0xf]
        %v804 = vld [vmem:[%s798 + $0x14] sm:$0xf]
        %v805 = vld [vmem:[%s798 + $0x18] sm:$0xf]
        %v806 = vld [vmem:[%s798 + $0x1c] sm:$0xf]
        %v807 = vld [vmem:[%s798 + $0x20] sm:$0xf]
        %v808 = vld [vmem:[%s798 + $0x24] sm:$0xf]
        %v809 = vld [vmem:[%s798 + $0x28] sm:$0xf]
        %v810 = vld [vmem:[%s798 + $0x2c] sm:$0xf]
        %v811 = vld [vmem:[%s798 + $0x30] sm:$0xf]
        %v812 = vld [vmem:[%s798 + $0x34] sm:$0xf]
        %v813 = vld [vmem:[%s798 + $0x38] sm:$0xf]
        %v814 = vld [vmem:[%s798 + $0x3c] sm:$0xf]
        %s815 = scalar_lea.vmem %s5, %s37
        %v816 = vld [vmem:[%s815] sm:$0x1]
        %v818 = vlaneseq
        %v819 = vshrl.u32 %v818, 7
        %v820 = vsub.s32 0, %v819
        %v821 = vrot.slane %v816, %v820
        %v839 = vunpack.c.l.b16 %v799
        %v840 = vunpack.c.l.b16 %v800
        %v841 = vunpack.c.l.b16 %v801
        %v842 = vunpack.c.l.b16 %v802
        %v843 = vunpack.c.l.b16 %v803
        %v844 = vunpack.c.l.b16 %v804
        %v845 = vunpack.c.l.b16 %v805
        %v846 = vunpack.c.l.b16 %v806
        %v847 = vunpack.c.l.b16 %v807
        %v848 = vunpack.c.l.b16 %v808
        %v849 = vunpack.c.l.b16 %v809
        %v850 = vunpack.c.l.b16 %v810
        %v851 = vunpack.c.l.b16 %v811
        %v852 = vunpack.c.l.b16 %v812
        %v853 = vunpack.c.l.b16 %v813
        %v854 = vunpack.c.l.b16 %v814
        %v855 = vpack.c.b16 %v840, %v839
        %v856 = vpack.c.b16 %v842, %v841
        %v857 = vpack.c.b16 %v844, %v843
        %v858 = vpack.c.b16 %v846, %v845
        %v859 = vpack.c.b16 %v848, %v847
        %v860 = vpack.c.b16 %v850, %v849
        %v861 = vpack.c.b16 %v852, %v851
        %v862 = vpack.c.b16 %v854, %v853
        %871 = vmatprep.subr.bf16.mxu0 0
        %872 = vmatpush1.bf16.msra.mxu0 %v862
        %873 = vmatprep.subr.bf16.mxu0 0
        %874 = vmatpush1.bf16.msra.mxu0 %v861
        %875 = vmatprep.subr.bf16.mxu0 0
        %876 = vmatpush1.bf16.msra.mxu0 %v860
        %877 = vmatprep.subr.bf16.mxu0 0
        %878 = vmatpush1.bf16.msra.mxu0 %v859
        %879 = vmatprep.subr.bf16.mxu0 0
        %880 = vmatpush1.bf16.msra.mxu0 %v858
        %881 = vmatprep.subr.bf16.mxu0 0
        %882 = vmatpush1.bf16.msra.mxu0 %v857
        %883 = vmatprep.subr.bf16.mxu0 0
        %884 = vmatpush1.bf16.msra.mxu0 %v856
        %885 = vmatprep.subr.bf16.mxu0 0
        %886 = vmatpush1.bf16.msra.mxu0 %v855
        %887 = vmatprep.subr.bf16.mxu0 0
        %888 = vmatpush2.bf16.msra.mxu0 0
        %889 = vmatprep.subr.bf16.mxu0 0
        %890 = vmatpush2.bf16.msra.mxu0 0
        %891 = vmatprep.subr.bf16.mxu0 0
        %892 = vmatpush2.bf16.msra.mxu0 0
        %893 = vmatprep.subr.bf16.mxu0 0
        %894 = vmatpush2.bf16.msra.mxu0 0
        %895 = vmatprep.subr.bf16.mxu0 0
        %896 = vmatpush2.bf16.msra.mxu0 0
        %897 = vmatprep.subr.bf16.mxu0 0
        %898 = vmatpush2.bf16.msra.mxu0 0
        %899 = vmatprep.subr.bf16.mxu0 0
        %900 = vmatpush2.bf16.msra.mxu0 0
        %901 = vmatprep.subr.bf16.mxu0 0
        %902 = vmatpush2.bf16.msra.mxu0 0
        %903 = vmatprep.mubr.bf16.mxu0 0
        %904 = vmatmul.mubr.bf16.gmra.mxu0 %v692
        %v905 = vpop.f32.mrf.mxu0
        %v906 = vadd.f32 %v821, %v905
        %v907 = vpop.f32.mrf.mxu0
        %v908 = vpop.f32.mrf.mxu0
        %v909 = vadd.f32 %v821, %v908
        %v910 = vpop.f32.mrf.mxu0
        %911 = vmatprep.mubr.bf16.mxu0 0
        %912 = vmatmul.mubr.bf16.gmra.mxu0 %v693
        %v913 = vpop.f32.mrf.mxu0
        %v914 = vadd.f32 %v821, %v913
        %v915 = vpop.f32.mrf.mxu0
        %v916 = vpop.f32.mrf.mxu0
        %v917 = vadd.f32 %v821, %v916
        %v918 = vpop.f32.mrf.mxu0
        %919 = vdwg.mxu0
        %s920 = smul.addr %s657, 4
        %s921 = scalar_lea.vmem %s6, %s920
        %v922 = vld [vmem:[%s921] sm:$0xf]
        %v923 = vld [vmem:[%s921 + $0x4] sm:$0xf]
        %v924 = vld [vmem:[%s921 + $0x8] sm:$0xf]
        %v925 = vld [vmem:[%s921 + $0xc] sm:$0xf]
        %v926 = vld [vmem:[%s921 + $0x10] sm:$0xf]
        %v927 = vld [vmem:[%s921 + $0x14] sm:$0xf]
        %v928 = vld [vmem:[%s921 + $0x18] sm:$0xf]
        %v929 = vld [vmem:[%s921 + $0x1c] sm:$0xf]
        %v930 = vld [vmem:[%s921 + $0x20] sm:$0xf]
        %v931 = vld [vmem:[%s921 + $0x24] sm:$0xf]
        %v932 = vld [vmem:[%s921 + $0x28] sm:$0xf]
        %v933 = vld [vmem:[%s921 + $0x2c] sm:$0xf]
        %v934 = vld [vmem:[%s921 + $0x30] sm:$0xf]
        %v935 = vld [vmem:[%s921 + $0x34] sm:$0xf]
        %v936 = vld [vmem:[%s921 + $0x38] sm:$0xf]
        %v937 = vld [vmem:[%s921 + $0x3c] sm:$0xf]
        %s938 = scalar_lea.vmem %s7, %s37
        %v939 = vld [vmem:[%s938] sm:$0x1]
        %v941 = vlaneseq
        %v942 = vshrl.u32 %v941, 7
        %v943 = vsub.s32 0, %v942
        %v944 = vrot.slane %v939, %v943
        %v962 = vunpack.c.l.b16 %v922
        %v963 = vunpack.c.l.b16 %v923
        %v964 = vunpack.c.l.b16 %v924
        %v965 = vunpack.c.l.b16 %v925
        %v966 = vunpack.c.l.b16 %v926
        %v967 = vunpack.c.l.b16 %v927
        %v968 = vunpack.c.l.b16 %v928
        %v969 = vunpack.c.l.b16 %v929
        %v970 = vunpack.c.l.b16 %v930
        %v971 = vunpack.c.l.b16 %v931
        %v972 = vunpack.c.l.b16 %v932
        %v973 = vunpack.c.l.b16 %v933
        %v974 = vunpack.c.l.b16 %v934
        %v975 = vunpack.c.l.b16 %v935
        %v976 = vunpack.c.l.b16 %v936
        %v977 = vunpack.c.l.b16 %v937
        %v978 = vpack.c.b16 %v963, %v962
        %v979 = vpack.c.b16 %v965, %v964
        %v980 = vpack.c.b16 %v967, %v966
        %v981 = vpack.c.b16 %v969, %v968
        %v982 = vpack.c.b16 %v971, %v970
        %v983 = vpack.c.b16 %v973, %v972
        %v984 = vpack.c.b16 %v975, %v974
        %v985 = vpack.c.b16 %v977, %v976
        %994 = vmatprep.subr.bf16.mxu0 0
        %995 = vmatpush1.bf16.msra.mxu0 %v985
        %996 = vmatprep.subr.bf16.mxu0 0
        %997 = vmatpush1.bf16.msra.mxu0 %v984
        %998 = vmatprep.subr.bf16.mxu0 0
        %999 = vmatpush1.bf16.msra.mxu0 %v983
        %1000 = vmatprep.subr.bf16.mxu0 0
        %1001 = vmatpush1.bf16.msra.mxu0 %v982
        %1002 = vmatprep.subr.bf16.mxu0 0
        %1003 = vmatpush1.bf16.msra.mxu0 %v981
        %1004 = vmatprep.subr.bf16.mxu0 0
        %1005 = vmatpush1.bf16.msra.mxu0 %v980
        %1006 = vmatprep.subr.bf16.mxu0 0
        %1007 = vmatpush1.bf16.msra.mxu0 %v979
        %1008 = vmatprep.subr.bf16.mxu0 0
        %1009 = vmatpush1.bf16.msra.mxu0 %v978
        %1010 = vmatprep.subr.bf16.mxu0 0
        %1011 = vmatpush2.bf16.msra.mxu0 0
        %1012 = vmatprep.subr.bf16.mxu0 0
        %1013 = vmatpush2.bf16.msra.mxu0 0
        %1014 = vmatprep.subr.bf16.mxu0 0
        %1015 = vmatpush2.bf16.msra.mxu0 0
        %1016 = vmatprep.subr.bf16.mxu0 0
        %1017 = vmatpush2.bf16.msra.mxu0 0
        %1018 = vmatprep.subr.bf16.mxu0 0
        %1019 = vmatpush2.bf16.msra.mxu0 0
        %1020 = vmatprep.subr.bf16.mxu0 0
        %1021 = vmatpush2.bf16.msra.mxu0 0
        %1022 = vmatprep.subr.bf16.mxu0 0
        %1023 = vmatpush2.bf16.msra.mxu0 0
        %1024 = vmatprep.subr.bf16.mxu0 0
        %1025 = vmatpush2.bf16.msra.mxu0 0
        %1026 = vmatprep.mubr.bf16.mxu0 0
        %1027 = vmatmul.mubr.bf16.gmra.mxu0 %v692
        %v1028 = vpop.f32.mrf.mxu0
        %v1029 = vadd.f32 %v944, %v1028
        %v1030 = vpop.f32.mrf.mxu0
        %v1031 = vpop.f32.mrf.mxu0
        %v1032 = vadd.f32 %v944, %v1031
        %v1033 = vpop.f32.mrf.mxu0
        %1034 = vmatprep.mubr.bf16.mxu0 0
        %1035 = vmatmul.mubr.bf16.gmra.mxu0 %v693
        %v1036 = vpop.f32.mrf.mxu0
        %v1037 = vadd.f32 %v944, %v1036
        %v1038 = vpop.f32.mrf.mxu0
        %v1039 = vpop.f32.mrf.mxu0
        %v1040 = vadd.f32 %v944, %v1039
        %v1041 = vpop.f32.mrf.mxu0
        %1042 = vdwg.mxu0
        %v1043 = vpack.c.bf16 %v794, %v793
        %v1044 = vpack.c.bf16 %v796, %v795
        %v1045 = vpack.c.bf16 %v909, %v906
        %v1046 = vpack.c.bf16 %v917, %v914
        %v1047 = vld [vmem:[%s619] sm:$0xf]
        %v1048 = vld [vmem:[%s619 + $0x4] sm:$0xf]
        %v1049 = vld [vmem:[%s619 + $0x8] sm:$0xf]
        %v1050 = vld [vmem:[%s619 + $0xc] sm:$0xf]
        %v1051 = vunpack.c.l.bf16 %v1047
        %v1052 = vunpack.c.l.bf16 %v1048
        %v1053 = vunpack.c.l.bf16 %v1049
        %v1054 = vunpack.c.l.bf16 %v1050
        %vm1055 = vcmask 261120
        %v1057 = vsel %vm1055, %v1043, 0
        %v1060 = vsel %vm1055, %v1044, 0
        %v1063 = vsel %vm1055, %v1045, 0
        %v1066 = vsel %vm1055, %v1046, 0
        %1068 = vmatprep.subr.bf16.mxu0 0
        %1069 = vmatpush1.bf16.xpose.msra.mxu0 0
        %1070 = vmatprep.subr.bf16.mxu0 0
        %1071 = vmatpush1.bf16.xpose.msra.mxu0 0
        %1072 = vmatprep.subr.bf16.mxu0 0
        %1073 = vmatpush1.bf16.xpose.msra.mxu0 0
        %1074 = vmatprep.subr.bf16.mxu0 0
        %1075 = vmatpush1.bf16.xpose.msra.mxu0 0
        %1076 = vmatprep.subr.bf16.mxu0 0
        %1077 = vmatpush1.bf16.xpose.msra.mxu0 0
        %1078 = vmatprep.subr.bf16.mxu0 0
        %1079 = vmatpush1.bf16.xpose.msra.mxu0 0
        %1080 = vmatprep.subr.bf16.mxu0 0
        %1081 = vmatpush1.bf16.xpose.msra.mxu0 %v1066
        %1082 = vmatprep.subr.bf16.mxu0 0
        %1083 = vmatpush1.bf16.xpose.msra.mxu0 %v1063
        %1084 = vmatprep.subr.bf16.mxu0 0
        %1085 = vmatpush2.bf16.xpose.msra.mxu0 0
        %1086 = vmatprep.subr.bf16.mxu0 0
        %1087 = vmatpush2.bf16.xpose.msra.mxu0 0
        %1088 = vmatprep.subr.bf16.mxu0 0
        %1089 = vmatpush2.bf16.xpose.msra.mxu0 0
        %1090 = vmatprep.subr.bf16.mxu0 0
        %1091 = vmatpush2.bf16.xpose.msra.mxu0 0
        %1092 = vmatprep.subr.bf16.mxu0 0
        %1093 = vmatpush2.bf16.xpose.msra.mxu0 0
        %1094 = vmatprep.subr.bf16.mxu0 0
        %1095 = vmatpush2.bf16.xpose.msra.mxu0 0
        %1096 = vmatprep.subr.bf16.mxu0 0
        %1097 = vmatpush2.bf16.xpose.msra.mxu0 0
        %1098 = vmatprep.subr.bf16.mxu0 0
        %1099 = vmatpush2.bf16.xpose.msra.mxu0 0
        %1100 = vmatprep.mubr.bf16.mxu0 0
        %1101 = vmatmul.mubr.bf16.gmra.mxu0 %v1057
        %v1102 = vpop.f32.mrf.mxu0
        %v1103 = vadd.f32 %v1051, %v1102
        %v1104 = vpop.f32.mrf.mxu0
        %v1105 = vpop.f32.mrf.mxu0
        %v1106 = vadd.f32 %v1052, %v1105
        %v1107 = vpop.f32.mrf.mxu0
        %1108 = vmatprep.mubr.bf16.mxu0 0
        %1109 = vmatmul.mubr.bf16.gmra.mxu0 %v1060
        %v1110 = vpop.f32.mrf.mxu0
        %v1111 = vadd.f32 %v1053, %v1110
        %v1112 = vpop.f32.mrf.mxu0
        %v1113 = vpop.f32.mrf.mxu0
        %v1114 = vadd.f32 %v1054, %v1113
        %v1115 = vpop.f32.mrf.mxu0
        %1116 = vdwg.mxu0
        %v1117 = vsel %vm1055, %v1103, -inf
        %1118 = vmax.xlane.f32.xlu0 %v1117
        %v1119 = vpop.xlane.xlu0 %1118
        %v1120 = vsel %vm1055, %v1106, -inf
        %1121 = vmax.xlane.f32.xlu0 %v1120
        %v1122 = vpop.xlane.xlu0 %1121
        %v1123 = vsel %vm1055, %v1111, -inf
        %1124 = vmax.xlane.f32.xlu0 %v1123
        %v1125 = vpop.xlane.xlu0 %1124
        %v1126 = vsel %vm1055, %v1114, -inf
        %1127 = vmax.xlane.f32.xlu0 %v1126
        %v1128 = vpop.xlane.xlu0 %1127
        %v1129 = vsub.f32 %v1103, %v1119
        %v1130 = vsub.f32 %v1106, %v1122
        %v1131 = vsub.f32 %v1111, %v1125
        %v1132 = vsub.f32 %v1114, %v1128
        %v1133 = vmul.f32 %v1129, 1.442695
        %v1134 = vpow.pop %v1133
        %v1135 = vmul.f32 %v1130, 1.442695
        %v1136 = vpow.pop %v1135
        %v1137 = vmul.f32 %v1131, 1.442695
        %v1138 = vpow.pop %v1137
        %v1139 = vmul.f32 %v1132, 1.442695
        %v1140 = vpow.pop %v1139
        %v1141 = vsel %vm1055, %v1134, 0.0
        %1142 = vadd.xlane.f32.xlu0 %v1141
        %v1143 = vpop.xlane.xlu0 %1142
        %v1144 = vsel %vm1055, %v1136, 0.0
        %1145 = vadd.xlane.f32.xlu0 %v1144
        %v1146 = vpop.xlane.xlu0 %1145
        %v1147 = vsel %vm1055, %v1138, 0.0
        %1148 = vadd.xlane.f32.xlu0 %v1147
        %v1149 = vpop.xlane.xlu0 %1148
        %v1150 = vsel %vm1055, %v1140, 0.0
        %1151 = vadd.xlane.f32.xlu0 %v1150
        %v1152 = vpop.xlane.xlu0 %1151
        %v1153 = vrcp.pop %v1143
        %v1154 = vrcp.pop %v1146
        %v1155 = vrcp.pop %v1149
        %v1156 = vrcp.pop %v1152
        %v1157 = vmul.f32 %v1134, %v1153
        %v1158 = vmul.f32 %v1136, %v1154
        %v1159 = vmul.f32 %v1138, %v1155
        %v1160 = vmul.f32 %v1140, %v1156
        %v1161 = vpack.c.bf16 %v1158, %v1157
        %v1162 = vpack.c.bf16 %v1160, %v1159
        %v1163 = vpack.c.bf16 %v1032, %v1029
        %v1164 = vpack.c.bf16 %v1040, %v1037
        %v1166 = vsel %vm1055, %v1161, 0
        %v1169 = vsel %vm1055, %v1162, 0
        %1171 = vmatprep.subr.bf16.mxu0 0
        %1172 = vmatpush1.bf16.msra.mxu0 0
        %1173 = vmatprep.subr.bf16.mxu0 0
        %1174 = vmatpush1.bf16.msra.mxu0 0
        %1175 = vmatprep.subr.bf16.mxu0 0
        %1176 = vmatpush1.bf16.msra.mxu0 0
        %1177 = vmatprep.subr.bf16.mxu0 0
        %1178 = vmatpush1.bf16.msra.mxu0 0
        %1179 = vmatprep.subr.bf16.mxu0 0
        %1180 = vmatpush1.bf16.msra.mxu0 0
        %1181 = vmatprep.subr.bf16.mxu0 0
        %1182 = vmatpush1.bf16.msra.mxu0 0
        %1183 = vmatprep.subr.bf16.mxu0 0
        %1184 = vmatpush1.bf16.msra.mxu0 %v1164
        %1185 = vmatprep.subr.bf16.mxu0 0
        %1186 = vmatpush1.bf16.msra.mxu0 %v1163
        %1187 = vmatprep.subr.bf16.mxu0 0
        %1188 = vmatpush2.bf16.msra.mxu0 0
        %1189 = vmatprep.subr.bf16.mxu0 0
        %1190 = vmatpush2.bf16.msra.mxu0 0
        %1191 = vmatprep.subr.bf16.mxu0 0
        %1192 = vmatpush2.bf16.msra.mxu0 0
        %1193 = vmatprep.subr.bf16.mxu0 0
        %1194 = vmatpush2.bf16.msra.mxu0 0
        %1195 = vmatprep.subr.bf16.mxu0 0
        %1196 = vmatpush2.bf16.msra.mxu0 0
        %1197 = vmatprep.subr.bf16.mxu0 0
        %1198 = vmatpush2.bf16.msra.mxu0 0
        %1199 = vmatprep.subr.bf16.mxu0 0
        %1200 = vmatpush2.bf16.msra.mxu0 0
        %1201 = vmatprep.subr.bf16.mxu0 0
        %1202 = vmatpush2.bf16.msra.mxu0 0
        %1203 = vmatprep.mubr.bf16.mxu0 0
        %1204 = vmatmul.mubr.bf16.gmra.mxu0 %v1166
        %v1205 = vpop.f32.mrf.mxu0
        %v1206 = vadd.f32 0.0, %v1205
        %v1207 = vpop.f32.mrf.mxu0
        %v1208 = vpop.f32.mrf.mxu0
        %v1209 = vadd.f32 0.0, %v1208
        %v1210 = vpop.f32.mrf.mxu0
        %1211 = vmatprep.mubr.bf16.mxu0 0
        %1212 = vmatmul.mubr.bf16.gmra.mxu0 %v1169
        %v1213 = vpop.f32.mrf.mxu0
        %v1214 = vadd.f32 0.0, %v1213
        %v1215 = vpop.f32.mrf.mxu0
        %v1216 = vpop.f32.mrf.mxu0
        %v1217 = vadd.f32 0.0, %v1216
        %v1218 = vpop.f32.mrf.mxu0
        %1219 = vdwg.mxu0
        %v1220 = vld [vmem:[#allocation2] sm:$0xff]
        %v1221 = vld [vmem:[#allocation2 + $0x8] sm:$0xff]
        %v1222 = vld [vmem:[#allocation2 + $0x10] sm:$0xff]
        %v1223 = vld [vmem:[#allocation2 + $0x18] sm:$0xff]
        %v1224 = vpack.c.bf16 %v1209, %v1206
        %v1225 = vpack.c.bf16 %v1217, %v1214
        %s1226 = smul.u32 %s37, 4
        %s1227 = smul.addr %s1226, 4
        %s1228 = scalar_lea.vmem %s8, %s1227
        %v1229 = vld [vmem:[%s1228] sm:$0xf]
        %v1230 = vld [vmem:[%s1228 + $0x4] sm:$0xf]
        %v1231 = vld [vmem:[%s1228 + $0x8] sm:$0xf]
        %v1232 = vld [vmem:[%s1228 + $0xc] sm:$0xf]
        %v1237 = vunpack.c.l.b16 %v1229
        %v1238 = vunpack.c.l.b16 %v1230
        %v1239 = vunpack.c.l.b16 %v1231
        %v1240 = vunpack.c.l.b16 %v1232
        %v1241 = vpack.c.b16 %v1238, %v1237
        %v1242 = vpack.c.b16 %v1240, %v1239
        %v1246 = vsel %vm1055, %v1224, 0
        %v1249 = vsel %vm1055, %v1225, 0
        %1251 = vmatprep.subr.bf16.mxu0 0
        %1252 = vmatpush1.bf16.msra.mxu0 0
        %1253 = vmatprep.subr.bf16.mxu0 0
        %1254 = vmatpush1.bf16.msra.mxu0 0
        %1255 = vmatprep.subr.bf16.mxu0 0
        %1256 = vmatpush1.bf16.msra.mxu0 0
        %1257 = vmatprep.subr.bf16.mxu0 0
        %1258 = vmatpush1.bf16.msra.mxu0 0
        %1259 = vmatprep.subr.bf16.mxu0 0
        %1260 = vmatpush1.bf16.msra.mxu0 0
        %1261 = vmatprep.subr.bf16.mxu0 0
        %1262 = vmatpush1.bf16.msra.mxu0 0
        %1263 = vmatprep.subr.bf16.mxu0 0
        %1264 = vmatpush1.bf16.msra.mxu0 %v1242
        %1265 = vmatprep.subr.bf16.mxu0 0
        %1266 = vmatpush1.bf16.msra.mxu0 %v1241
        %1267 = vmatprep.subr.bf16.mxu0 0
        %1268 = vmatpush2.bf16.msra.mxu0 0
        %1269 = vmatprep.subr.bf16.mxu0 0
        %1270 = vmatpush2.bf16.msra.mxu0 0
        %1271 = vmatprep.subr.bf16.mxu0 0
        %1272 = vmatpush2.bf16.msra.mxu0 0
        %1273 = vmatprep.subr.bf16.mxu0 0
        %1274 = vmatpush2.bf16.msra.mxu0 0
        %1275 = vmatprep.subr.bf16.mxu0 0
        %1276 = vmatpush2.bf16.msra.mxu0 0
        %1277 = vmatprep.subr.bf16.mxu0 0
        %1278 = vmatpush2.bf16.msra.mxu0 0
        %1279 = vmatprep.subr.bf16.mxu0 0
        %1280 = vmatpush2.bf16.msra.mxu0 0
        %1281 = vmatprep.subr.bf16.mxu0 0
        %1282 = vmatpush2.bf16.msra.mxu0 0
        %1283 = vmatprep.mubr.bf16.mxu0 0
        %1284 = vmatmul.mubr.bf16.gmra.mxu0 %v1246
        %v1285 = vpop.f32.mrf.mxu0
        %v1286 = vadd.f32 0.0, %v1285
        %v1287 = vpop.f32.mrf.mxu0
        %v1288 = vpop.f32.mrf.mxu0
        %v1289 = vadd.f32 0.0, %v1288
        %v1290 = vpop.f32.mrf.mxu0
        %1291 = vmatprep.mubr.bf16.mxu0 0
        %1292 = vmatmul.mubr.bf16.gmra.mxu0 %v1249
        %v1293 = vpop.f32.mrf.mxu0
        %v1294 = vadd.f32 0.0, %v1293
        %v1295 = vpop.f32.mrf.mxu0
        %v1296 = vpop.f32.mrf.mxu0
        %v1297 = vadd.f32 0.0, %v1296
        %v1298 = vpop.f32.mrf.mxu0
        %1299 = vdwg.mxu0
        %v1300 = vadd.f32 %v1220, %v1286
        %v1301 = vadd.f32 %v1221, %v1289
        %v1302 = vadd.f32 %v1222, %v1294
        %v1303 = vadd.f32 %v1223, %v1297
        %1304 = vst [vmem:[#allocation2] sm:$0xff] %v1300
        %1305 = vst [vmem:[#allocation2 + $0x8] sm:$0xff] %v1301
        %1306 = vst [vmem:[#allocation2 + $0x10] sm:$0xff] %v1302
        %1307 = vst [vmem:[#allocation2 + $0x18] sm:$0xff] %v1303
        %p1308 = scmp.eq.s32.totalorder %s37, 3
        // Predicated region
        $region97: #{tpu_custom_call.1} parent=91 // pred_check
          %p1309 = pneg %p1308
        $region98: #{tpu_custom_call.1} parent=91 // pred_check_branch
          %1311 = sbr.rel (%p1309) target = $region100
        $region99: #{tpu_custom_call.1} parent=91 // pred_region
          %v1312 = vld [vmem:[%s610] sm:$0xff]
          %v1313 = vld [vmem:[%s610 + $0x8] sm:$0xff]
          %v1314 = vld [vmem:[%s610 + $0x10] sm:$0xff]
          %v1315 = vld [vmem:[%s610 + $0x18] sm:$0xff]
          %v1316 = vld [vmem:[#allocation2] sm:$0xff]
          %v1317 = vld [vmem:[#allocation2 + $0x8] sm:$0xff]
          %v1318 = vld [vmem:[#allocation2 + $0x10] sm:$0xff]
          %v1319 = vld [vmem:[#allocation2 + $0x18] sm:$0xff]
          %v1320 = vld [vmem:[%s9] sm:$0x1]
          %v1322 = vlaneseq
          %v1323 = vshrl.u32 %v1322, 7
          %v1324 = vsub.s32 0, %v1323
          %v1325 = vrot.slane %v1320, %v1324
          %v1327 = vadd.f32 %v1316, %v1325
          %v1328 = vadd.f32 %v1317, %v1325
          %v1329 = vadd.f32 %v1318, %v1325
          %v1330 = vadd.f32 %v1319, %v1325
          %v1331 = vadd.f32 %v1312, %v1327
          %v1332 = vadd.f32 %v1313, %v1328
          %v1333 = vadd.f32 %v1314, %v1329
          %v1334 = vadd.f32 %v1315, %v1330
          %v1335 = vld [vmem:[%s10] sm:$0x1]
          %v1336 = vld [vmem:[%s11] sm:$0x1]
          %1337 = vadd.xlane.f32.xlu0 %v1331
          %v1338 = vpop.xlane.xlu0 %1337
          %1339 = vadd.xlane.f32.xlu0 %v1332
          %v1340 = vpop.xlane.xlu0 %1339
          %1341 = vadd.xlane.f32.xlu0 %v1333
          %v1342 = vpop.xlane.xlu0 %1341
          %1343 = vadd.xlane.f32.xlu0 %v1334
          %v1344 = vpop.xlane.xlu0 %1343
          %v1345 = vrcp.pop 128.0
          %v1346 = vmul.f32 %v1338, %v1345
          %v1347 = vmul.f32 %v1340, %v1345
          %v1348 = vmul.f32 %v1342, %v1345
          %v1349 = vmul.f32 %v1344, %v1345
          %v1350 = vsub.f32 %v1331, %v1346
          %v1351 = vsub.f32 %v1332, %v1347
          %v1352 = vsub.f32 %v1333, %v1348
          %v1353 = vsub.f32 %v1334, %v1349
          %v1354 = vmul.f32 %v1350, %v1350
          %v1355 = vmul.f32 %v1351, %v1351
          %v1356 = vmul.f32 %v1352, %v1352
          %v1357 = vmul.f32 %v1353, %v1353
          %1358 = vadd.xlane.f32.xlu0 %v1354
          %v1359 = vpop.xlane.xlu0 %1358
          %1360 = vadd.xlane.f32.xlu0 %v1355
          %v1361 = vpop.xlane.xlu0 %1360
          %1362 = vadd.xlane.f32.xlu0 %v1356
          %v1363 = vpop.xlane.xlu0 %1362
          %1364 = vadd.xlane.f32.xlu0 %v1357
          %v1365 = vpop.xlane.xlu0 %1364
          %v1366 = vmul.f32 %v1359, %v1345
          %v1367 = vmul.f32 %v1361, %v1345
          %v1368 = vmul.f32 %v1363, %v1345
          %v1369 = vmul.f32 %v1365, %v1345
          %v1370 = vadd.f32 %v1366, 1e-05
          %v1371 = vadd.f32 %v1367, 1e-05
          %v1372 = vadd.f32 %v1368, 1e-05
          %v1373 = vadd.f32 %v1369, 1e-05
          %v1374 = vrsqrt.pop %v1370
          %v1375 = vrsqrt.pop %v1371
          %v1376 = vrsqrt.pop %v1372
          %v1377 = vrsqrt.pop %v1373
          %v1378 = vmul.f32 %v1350, %v1374
          %v1379 = vmul.f32 %v1351, %v1375
          %v1380 = vmul.f32 %v1352, %v1376
          %v1381 = vmul.f32 %v1353, %v1377
          %v1383 = vlaneseq
          %v1384 = vshrl.u32 %v1383, 7
          %v1385 = vsub.s32 0, %v1384
          %v1386 = vrot.slane %v1335, %v1385
          %v1388 = vmul.f32 %v1378, %v1386
          %v1389 = vmul.f32 %v1379, %v1386
          %v1390 = vmul.f32 %v1380, %v1386
          %v1391 = vmul.f32 %v1381, %v1386
          %v1393 = vlaneseq
          %v1394 = vshrl.u32 %v1393, 7
          %v1395 = vsub.s32 0, %v1394
          %v1396 = vrot.slane %v1336, %v1395
          %v1398 = vadd.f32 %v1388, %v1396
          %v1399 = vadd.f32 %v1389, %v1396
          %v1400 = vadd.f32 %v1390, %v1396
          %v1401 = vadd.f32 %v1391, %v1396
          %v1402 = vpack.c.bf16 %v1399, %v1398
          %v1403 = vpack.c.bf16 %v1401, %v1400
          %v1404 = vld [vmem:[%s12] sm:$0xff]
          %v1405 = vld [vmem:[%s12 + $0x8] sm:$0xff]
          %v1406 = vld [vmem:[%s12 + $0x10] sm:$0xff]
          %v1407 = vld [vmem:[%s12 + $0x18] sm:$0xff]
          %v1408 = vld [vmem:[%s12 + $0x20] sm:$0xff]
          %v1409 = vld [vmem:[%s12 + $0x28] sm:$0xff]
          %v1410 = vld [vmem:[%s12 + $0x30] sm:$0xff]
          %v1411 = vld [vmem:[%s12 + $0x38] sm:$0xff]
          %v1412 = vld [vmem:[%s12 + $0x40] sm:$0xff]
          %v1413 = vld [vmem:[%s12 + $0x48] sm:$0xff]
          %v1414 = vld [vmem:[%s12 + $0x50] sm:$0xff]
          %v1415 = vld [vmem:[%s12 + $0x58] sm:$0xff]
          %v1416 = vld [vmem:[%s12 + $0x60] sm:$0xff]
          %v1417 = vld [vmem:[%s12 + $0x68] sm:$0xff]
          %v1418 = vld [vmem:[%s12 + $0x70] sm:$0xff]
          %v1419 = vld [vmem:[%s12 + $0x78] sm:$0xff]
          %v1420 = vld [vmem:[%s13] sm:$0x3]
          %v1422 = vlaneseq
          %v1423 = vshrl.u32 %v1422, 7
          %v1424 = vsub.s32 0, %v1423
          %v1425 = vrot.slane %v1420, %v1424
          %v1426 = vlaneseq
          %v1427 = vshrl.u32 %v1426, 7
          %v1428 = vsub.s32 1, %v1427
          %v1429 = vrot.slane %v1420, %v1428
          %v1448 = vunpack.c.l.b16 %v1404
          %v1449 = vunpack.c.h.b16 %v1404
          %v1450 = vunpack.c.l.b16 %v1405
          %v1451 = vunpack.c.h.b16 %v1405
          %v1452 = vunpack.c.l.b16 %v1406
          %v1453 = vunpack.c.h.b16 %v1406
          %v1454 = vunpack.c.l.b16 %v1407
          %v1455 = vunpack.c.h.b16 %v1407
          %v1456 = vunpack.c.l.b16 %v1408
          %v1457 = vunpack.c.h.b16 %v1408
          %v1458 = vunpack.c.l.b16 %v1409
          %v1459 = vunpack.c.h.b16 %v1409
          %v1460 = vunpack.c.l.b16 %v1410
          %v1461 = vunpack.c.h.b16 %v1410
          %v1462 = vunpack.c.l.b16 %v1411
          %v1463 = vunpack.c.h.b16 %v1411
          %v1464 = vunpack.c.l.b16 %v1412
          %v1465 = vunpack.c.h.b16 %v1412
          %v1466 = vunpack.c.l.b16 %v1413
          %v1467 = vunpack.c.h.b16 %v1413
          %v1468 = vunpack.c.l.b16 %v1414
          %v1469 = vunpack.c.h.b16 %v1414
          %v1470 = vunpack.c.l.b16 %v1415
          %v1471 = vunpack.c.h.b16 %v1415
          %v1472 = vunpack.c.l.b16 %v1416
          %v1473 = vunpack.c.h.b16 %v1416
          %v1474 = vunpack.c.l.b16 %v1417
          %v1475 = vunpack.c.h.b16 %v1417
          %v1476 = vunpack.c.l.b16 %v1418
          %v1477 = vunpack.c.h.b16 %v1418
          %v1478 = vunpack.c.l.b16 %v1419
          %v1479 = vunpack.c.h.b16 %v1419
          %v1480 = vpack.c.b16 %v1450, %v1448
          %v1481 = vpack.c.b16 %v1451, %v1449
          %v1482 = vpack.c.b16 %v1454, %v1452
          %v1483 = vpack.c.b16 %v1455, %v1453
          %v1484 = vpack.c.b16 %v1458, %v1456
          %v1485 = vpack.c.b16 %v1459, %v1457
          %v1486 = vpack.c.b16 %v1462, %v1460
          %v1487 = vpack.c.b16 %v1463, %v1461
          %v1488 = vpack.c.b16 %v1466, %v1464
          %v1489 = vpack.c.b16 %v1467, %v1465
          %v1490 = vpack.c.b16 %v1470, %v1468
          %v1491 = vpack.c.b16 %v1471, %v1469
          %v1492 = vpack.c.b16 %v1474, %v1472
          %v1493 = vpack.c.b16 %v1475, %v1473
          %v1494 = vpack.c.b16 %v1478, %v1476
          %v1495 = vpack.c.b16 %v1479, %v1477
          %1512 = vmatprep.subr.bf16.mxu0 %v1495
          %1513 = vmatpush1.bf16.msra.mxu0 %v1494
          %1514 = vmatprep.subr.bf16.mxu0 %v1493
          %1515 = vmatpush1.bf16.msra.mxu0 %v1492
          %1516 = vmatprep.subr.bf16.mxu0 %v1491
          %1517 = vmatpush1.bf16.msra.mxu0 %v1490
          %1518 = vmatprep.subr.bf16.mxu0 %v1489
          %1519 = vmatpush1.bf16.msra.mxu0 %v1488
          %1520 = vmatprep.subr.bf16.mxu0 %v1487
          %1521 = vmatpush1.bf16.msra.mxu0 %v1486
          %1522 = vmatprep.subr.bf16.mxu0 %v1485
          %1523 = vmatpush1.bf16.msra.mxu0 %v1484
          %1524 = vmatprep.subr.bf16.mxu0 %v1483
          %1525 = vmatpush1.bf16.msra.mxu0 %v1482
          %1526 = vmatprep.subr.bf16.mxu0 %v1481
          %1527 = vmatpush1.bf16.msra.mxu0 %v1480
          %1528 = vmatprep.subr.bf16.mxu0 0
          %1529 = vmatpush2.bf16.msra.mxu0 0
          %1530 = vmatprep.subr.bf16.mxu0 0
          %1531 = vmatpush2.bf16.msra.mxu0 0
          %1532 = vmatprep.subr.bf16.mxu0 0
          %1533 = vmatpush2.bf16.msra.mxu0 0
          %1534 = vmatprep.subr.bf16.mxu0 0
          %1535 = vmatpush2.bf16.msra.mxu0 0
          %1536 = vmatprep.subr.bf16.mxu0 0
          %1537 = vmatpush2.bf16.msra.mxu0 0
          %1538 = vmatprep.subr.bf16.mxu0 0
          %1539 = vmatpush2.bf16.msra.mxu0 0
          %1540 = vmatprep.subr.bf16.mxu0 0
          %1541 = vmatpush2.bf16.msra.mxu0 0
          %1542 = vmatprep.subr.bf16.mxu0 0
          %1543 = vmatpush2.bf16.msra.mxu0 0
          %1544 = vmatprep.mubr.bf16.mxu0 0
          %1545 = vmatmul.mubr.bf16.gmra.mxu0 %v1402
          %v1546 = vpop.f32.mrf.mxu0
          %v1547 = vadd.f32 %v1425, %v1546
          %v1548 = vpop.f32.mrf.mxu0
          %v1549 = vadd.f32 %v1429, %v1548
          %v1550 = vpop.f32.mrf.mxu0
          %v1551 = vadd.f32 %v1425, %v1550
          %v1552 = vpop.f32.mrf.mxu0
          %v1553 = vadd.f32 %v1429, %v1552
          %1554 = vmatprep.mubr.bf16.mxu0 0
          %1555 = vmatmul.mubr.bf16.gmra.mxu0 %v1403
          %v1556 = vpop.f32.mrf.mxu0
          %v1557 = vadd.f32 %v1425, %v1556
          %v1558 = vpop.f32.mrf.mxu0
          %v1559 = vadd.f32 %v1429, %v1558
          %v1560 = vpop.f32.mrf.mxu0
          %v1561 = vadd.f32 %v1425, %v1560
          %v1562 = vpop.f32.mrf.mxu0
          %v1563 = vadd.f32 %v1429, %v1562
          %1564 = vdwg.mxu0
          %v1565 = vmax.f32 %v1547, 0.0
          %v1566 = vmax.f32 %v1549, 0.0
          %v1567 = vmax.f32 %v1551, 0.0
          %v1568 = vmax.f32 %v1553, 0.0
          %v1569 = vmax.f32 %v1557, 0.0
          %v1570 = vmax.f32 %v1559, 0.0
          %v1571 = vmax.f32 %v1561, 0.0
          %v1572 = vmax.f32 %v1563, 0.0
          %v1573 = vpack.c.bf16 %v1567, %v1565
          %v1574 = vpack.c.bf16 %v1568, %v1566
          %v1575 = vpack.c.bf16 %v1571, %v1569
          %v1576 = vpack.c.bf16 %v1572, %v1570
          %v1577 = vld [vmem:[%s14] sm:$0xf]
          %v1578 = vld [vmem:[%s14 + $0x4] sm:$0xf]
          %v1579 = vld [vmem:[%s14 + $0x8] sm:$0xf]
          %v1580 = vld [vmem:[%s14 + $0xc] sm:$0xf]
          %v1581 = vld [vmem:[%s14 + $0x10] sm:$0xf]
          %v1582 = vld [vmem:[%s14 + $0x14] sm:$0xf]
          %v1583 = vld [vmem:[%s14 + $0x18] sm:$0xf]
          %v1584 = vld [vmem:[%s14 + $0x1c] sm:$0xf]
          %v1585 = vld [vmem:[%s14 + $0x20] sm:$0xf]
          %v1586 = vld [vmem:[%s14 + $0x24] sm:$0xf]
          %v1587 = vld [vmem:[%s14 + $0x28] sm:$0xf]
          %v1588 = vld [vmem:[%s14 + $0x2c] sm:$0xf]
          %v1589 = vld [vmem:[%s14 + $0x30] sm:$0xf]
          %v1590 = vld [vmem:[%s14 + $0x34] sm:$0xf]
          %v1591 = vld [vmem:[%s14 + $0x38] sm:$0xf]
          %v1592 = vld [vmem:[%s14 + $0x3c] sm:$0xf]
          %v1593 = vld [vmem:[%s14 + $0x40] sm:$0xf]
          %v1594 = vld [vmem:[%s14 + $0x44] sm:$0xf]
          %v1595 = vld [vmem:[%s14 + $0x48] sm:$0xf]
          %v1596 = vld [vmem:[%s14 + $0x4c] sm:$0xf]
          %v1597 = vld [vmem:[%s14 + $0x50] sm:$0xf]
          %v1598 = vld [vmem:[%s14 + $0x54] sm:$0xf]
          %v1599 = vld [vmem:[%s14 + $0x58] sm:$0xf]
          %v1600 = vld [vmem:[%s14 + $0x5c] sm:$0xf]
          %v1601 = vld [vmem:[%s14 + $0x60] sm:$0xf]
          %v1602 = vld [vmem:[%s14 + $0x64] sm:$0xf]
          %v1603 = vld [vmem:[%s14 + $0x68] sm:$0xf]
          %v1604 = vld [vmem:[%s14 + $0x6c] sm:$0xf]
          %v1605 = vld [vmem:[%s14 + $0x70] sm:$0xf]
          %v1606 = vld [vmem:[%s14 + $0x74] sm:$0xf]
          %v1607 = vld [vmem:[%s14 + $0x78] sm:$0xf]
          %v1608 = vld [vmem:[%s14 + $0x7c] sm:$0xf]
          %v1609 = vld [vmem:[%s15] sm:$0x1]
          %v1611 = vlaneseq
          %v1612 = vshrl.u32 %v1611, 7
          %v1613 = vsub.s32 0, %v1612
          %v1614 = vrot.slane %v1609, %v1613
          %v1648 = vunpack.c.l.b16 %v1577
          %v1649 = vunpack.c.l.b16 %v1578
          %v1650 = vunpack.c.l.b16 %v1579
          %v1651 = vunpack.c.l.b16 %v1580
          %v1652 = vunpack.c.l.b16 %v1581
          %v1653 = vunpack.c.l.b16 %v1582
          %v1654 = vunpack.c.l.b16 %v1583
          %v1655 = vunpack.c.l.b16 %v1584
          %v1656 = vunpack.c.l.b16 %v1585
          %v1657 = vunpack.c.l.b16 %v1586
          %v1658 = vunpack.c.l.b16 %v1587
          %v1659 = vunpack.c.l.b16 %v1588
          %v1660 = vunpack.c.l.b16 %v1589
          %v1661 = vunpack.c.l.b16 %v1590
          %v1662 = vunpack.c.l.b16 %v1591
          %v1663 = vunpack.c.l.b16 %v1592
          %v1664 = vunpack.c.l.b16 %v1593
          %v1665 = vunpack.c.l.b16 %v1594
          %v1666 = vunpack.c.l.b16 %v1595
          %v1667 = vunpack.c.l.b16 %v1596
          %v1668 = vunpack.c.l.b16 %v1597
          %v1669 = vunpack.c.l.b16 %v1598
          %v1670 = vunpack.c.l.b16 %v1599
          %v1671 = vunpack.c.l.b16 %v1600
          %v1672 = vunpack.c.l.b16 %v1601
          %v1673 = vunpack.c.l.b16 %v1602
          %v1674 = vunpack.c.l.b16 %v1603
          %v1675 = vunpack.c.l.b16 %v1604
          %v1676 = vunpack.c.l.b16 %v1605
          %v1677 = vunpack.c.l.b16 %v1606
          %v1678 = vunpack.c.l.b16 %v1607
          %v1679 = vunpack.c.l.b16 %v1608
          %v1680 = vpack.c.b16 %v1649, %v1648
          %v1681 = vpack.c.b16 %v1651, %v1650
          %v1682 = vpack.c.b16 %v1653, %v1652
          %v1683 = vpack.c.b16 %v1655, %v1654
          %v1684 = vpack.c.b16 %v1657, %v1656
          %v1685 = vpack.c.b16 %v1659, %v1658
          %v1686 = vpack.c.b16 %v1661, %v1660
          %v1687 = vpack.c.b16 %v1663, %v1662
          %v1688 = vpack.c.b16 %v1665, %v1664
          %v1689 = vpack.c.b16 %v1667, %v1666
          %v1690 = vpack.c.b16 %v1669, %v1668
          %v1691 = vpack.c.b16 %v1671, %v1670
          %v1692 = vpack.c.b16 %v1673, %v1672
          %v1693 = vpack.c.b16 %v1675, %v1674
          %v1694 = vpack.c.b16 %v1677, %v1676
          %v1695 = vpack.c.b16 %v1679, %v1678
          %1712 = vmatprep.subr.bf16.mxu0 0
          %1713 = vmatpush1.bf16.msra.mxu0 %v1687
          %1714 = vmatprep.subr.bf16.mxu0 0
          %1715 = vmatpush1.bf16.msra.mxu0 %v1686
          %1716 = vmatprep.subr.bf16.mxu0 0
          %1717 = vmatpush1.bf16.msra.mxu0 %v1685
          %1718 = vmatprep.subr.bf16.mxu0 0
          %1719 = vmatpush1.bf16.msra.mxu0 %v1684
          %1720 = vmatprep.subr.bf16.mxu0 0
          %1721 = vmatpush1.bf16.msra.mxu0 %v1683
          %1722 = vmatprep.subr.bf16.mxu0 0
          %1723 = vmatpush1.bf16.msra.mxu0 %v1682
          %1724 = vmatprep.subr.bf16.mxu0 0
          %1725 = vmatpush1.bf16.msra.mxu0 %v1681
          %1726 = vmatprep.subr.bf16.mxu0 0
          %1727 = vmatpush1.bf16.msra.mxu0 %v1680
          %1728 = vmatprep.subr.bf16.mxu0 0
          %1729 = vmatpush2.bf16.msra.mxu0 %v1695
          %1730 = vmatprep.subr.bf16.mxu0 0
          %1731 = vmatpush2.bf16.msra.mxu0 %v1694
          %1732 = vmatprep.subr.bf16.mxu0 0
          %1733 = vmatpush2.bf16.msra.mxu0 %v1693
          %1734 = vmatprep.subr.bf16.mxu0 0
          %1735 = vmatpush2.bf16.msra.mxu0 %v1692
          %1736 = vmatprep.subr.bf16.mxu0 0
          %1737 = vmatpush2.bf16.msra.mxu0 %v1691
          %1738 = vmatprep.subr.bf16.mxu0 0
          %1739 = vmatpush2.bf16.msra.mxu0 %v1690
          %1740 = vmatprep.subr.bf16.mxu0 0
          %1741 = vmatpush2.bf16.msra.mxu0 %v1689
          %1742 = vmatprep.subr.bf16.mxu0 0
          %1743 = vmatpush2.bf16.msra.mxu0 %v1688
          %1744 = vmatprep.mubr.bf16.mxu0 %v1574
          %1745 = vmatmul.mubr.bf16.gmra.mxu0 %v1573
          %v1746 = vpop.f32.mrf.mxu0
          %v1747 = vadd.f32 %v1614, %v1746
          %v1748 = vpop.f32.mrf.mxu0
          %v1749 = vpop.f32.mrf.mxu0
          %v1750 = vadd.f32 %v1614, %v1749
          %v1751 = vpop.f32.mrf.mxu0
          %1752 = vmatprep.mubr.bf16.mxu0 %v1576
          %1753 = vmatmul.mubr.bf16.gmra.mxu0 %v1575
          %v1754 = vpop.f32.mrf.mxu0
          %v1755 = vadd.f32 %v1614, %v1754
          %v1756 = vpop.f32.mrf.mxu0
          %v1757 = vpop.f32.mrf.mxu0
          %v1758 = vadd.f32 %v1614, %v1757
          %v1759 = vpop.f32.mrf.mxu0
          %1760 = vdwg.mxu0
          %v1761 = vadd.f32 %v1398, %v1747
          %v1762 = vadd.f32 %v1399, %v1750
          %v1763 = vadd.f32 %v1400, %v1755
          %v1764 = vadd.f32 %v1401, %v1758
          %v1765 = vld [vmem:[%s16] sm:$0x1]
          %v1766 = vld [vmem:[%s17] sm:$0x1]
          %1767 = vadd.xlane.f32.xlu0 %v1761
          %v1768 = vpop.xlane.xlu0 %1767
          %1769 = vadd.xlane.f32.xlu0 %v1762
          %v1770 = vpop.xlane.xlu0 %1769
          %1771 = vadd.xlane.f32.xlu0 %v1763
          %v1772 = vpop.xlane.xlu0 %1771
          %1773 = vadd.xlane.f32.xlu0 %v1764
          %v1774 = vpop.xlane.xlu0 %1773
          %v1775 = vmul.f32 %v1768, %v1345
          %v1776 = vmul.f32 %v1770, %v1345
          %v1777 = vmul.f32 %v1772, %v1345
          %v1778 = vmul.f32 %v1774, %v1345
          %v1779 = vsub.f32 %v1761, %v1775
          %v1780 = vsub.f32 %v1762, %v1776
          %v1781 = vsub.f32 %v1763, %v1777
          %v1782 = vsub.f32 %v1764, %v1778
          %v1783 = vmul.f32 %v1779, %v1779
          %v1784 = vmul.f32 %v1780, %v1780
          %v1785 = vmul.f32 %v1781, %v1781
          %v1786 = vmul.f32 %v1782, %v1782
          %1787 = vadd.xlane.f32.xlu0 %v1783
          %v1788 = vpop.xlane.xlu0 %1787
          %1789 = vadd.xlane.f32.xlu0 %v1784
          %v1790 = vpop.xlane.xlu0 %1789
          %1791 = vadd.xlane.f32.xlu0 %v1785
          %v1792 = vpop.xlane.xlu0 %1791
          %1793 = vadd.xlane.f32.xlu0 %v1786
          %v1794 = vpop.xlane.xlu0 %1793
          %v1795 = vmul.f32 %v1788, %v1345
          %v1796 = vmul.f32 %v1790, %v1345
          %v1797 = vmul.f32 %v1792, %v1345
          %v1798 = vmul.f32 %v1794, %v1345
          %v1799 = vadd.f32 %v1795, 1e-05
          %v1800 = vadd.f32 %v1796, 1e-05
          %v1801 = vadd.f32 %v1797, 1e-05
          %v1802 = vadd.f32 %v1798, 1e-05
          %v1803 = vrsqrt.pop %v1799
          %v1804 = vrsqrt.pop %v1800
          %v1805 = vrsqrt.pop %v1801
          %v1806 = vrsqrt.pop %v1802
          %v1807 = vmul.f32 %v1779, %v1803
          %v1808 = vmul.f32 %v1780, %v1804
          %v1809 = vmul.f32 %v1781, %v1805
          %v1810 = vmul.f32 %v1782, %v1806
          %v1812 = vlaneseq
          %v1813 = vshrl.u32 %v1812, 7
          %v1814 = vsub.s32 0, %v1813
          %v1815 = vrot.slane %v1765, %v1814
          %v1817 = vmul.f32 %v1807, %v1815
          %v1818 = vmul.f32 %v1808, %v1815
          %v1819 = vmul.f32 %v1809, %v1815
          %v1820 = vmul.f32 %v1810, %v1815
          %v1822 = vlaneseq
          %v1823 = vshrl.u32 %v1822, 7
          %v1824 = vsub.s32 0, %v1823
          %v1825 = vrot.slane %v1766, %v1824
          %v1827 = vadd.f32 %v1817, %v1825
          %v1828 = vadd.f32 %v1818, %v1825
          %v1829 = vadd.f32 %v1819, %v1825
          %v1830 = vadd.f32 %v1820, %v1825
          %1831 = vst [vmem:[%s605] sm:$0xff] %v1827
          %1832 = vst [vmem:[%s605 + $0x8] sm:$0xff] %v1828
          %1833 = vst [vmem:[%s605 + $0x10] sm:$0xff] %v1829
          %1834 = vst [vmem:[%s605 + $0x18] sm:$0xff] %v1830
        $region100: #{tpu_custom_call.1} parent=91 // pred_fallthru
          _
        %s1835 = sand.u32 %s442, 1
        %s1836 = scalar_lea.sflag [#allocation5], %s1835
        %s1837 = sand.u32 %s442, 1
        %s1838 = smul.addr %s1837, 32
        %s1839 = scalar_lea.vmem [#allocation4], %s1838
        // Predicated region
        $region101: #{tpu_custom_call.1} parent=91 // pred_check
          %p1840 = pneg %p452
        $region102: #{tpu_custom_call.1} parent=91 // pred_check_branch
          %1842 = sbr.rel (%p1840) target = $region104
        $region103: #{tpu_custom_call.1} parent=91 // pred_region
          %s1844 = ssub.s32 512, 512
          %1845 = vsyncadd %s1836, %s1844
          %s1846 = smul.addr %s36, 4
          %s1847 = smul.addr %s1846, 128
          %s1848 = scalar_lea.hbm %s18, %s1847
          %s1849 = sshll.u32 %s1839, 4
          %s1850 = int_to_ptr.vmem [resolvable:$true] %s1849
          %1855 = dma.vmem_to_hbm [thread:$0]  %s1850, 512, %s1848, %s1836, 128, 128, 8
        $region104: #{tpu_custom_call.1} parent=91 // pred_fallthru
          _
      $region92: #{tpu_custom_call.1} parent=5 // pred_fallthru
        _
      %p1856 = scmp.le.s32.totalorder 2, %s27
      // Predicated region
      $region105: #{tpu_custom_call.1} parent=5 // pred_check
        %p1857 = pneg %p1856
      $region106: #{tpu_custom_call.1} parent=5 // pred_check_branch
        %1859 = sbr.rel (%p1857) target = $region108
      $region107: #{tpu_custom_call.1} parent=5 // pred_region
        %s1860 = ssub.s32 %s27, 2
        // Predicated region
        $region109: #{tpu_custom_call.1} parent=107 // pred_check
          %p1861 = pneg %p458
        $region110: #{tpu_custom_call.1} parent=107 // pred_check_branch
          %1863 = sbr.rel (%p1861) target = $region112
        $region111: #{tpu_custom_call.1} parent=107 // pred_region
          %s1864 = sand.u32 %s443, 1
          %s1865 = scalar_lea.sflag [#allocation5], %s1864
          %s1866 = sand.u32 %s443, 1
          %s1867 = smul.addr %s1866, 32
          %s1868 = scalar_lea.vmem [#allocation4], %s1867
          %1869 = dma.done %s1865, 512
        $region112: #{tpu_custom_call.1} parent=107 // pred_fallthru
          _
      $region108: #{tpu_custom_call.1} parent=5 // pred_fallthru
        _
    $region6: #{tpu_custom_call.1} parent=1 // loop_footer
      %s31 = sadd.s32 1, %s27
    $region7: #{tpu_custom_call.1} parent=1 // loop_footer_branch
      %26 = sbr.rel target = $region3
    $region8: #{tpu_custom_call.1} parent=1 // loop_exit
      _
    %1870 = vsyncpa [#allocation5], 1
    %s1871 = scalar_lea.sflag [#allocation5], 1
    %1872 = vsyncpa %s1871, 1

</llo_original>
